<compile_context>
chip_gen: v7x
topology: tpu7x:2x2x1
jax: 0.10.0
libtpu: 0.0.40
codegen_flags: <defaults>
</compile_context>

<pallas_src>
import jax
import jax.numpy as jnp
from jax import lax
from jax.experimental import pallas as pl
from jax.experimental.pallas import tpu as pltpu

VMEM_LIMIT = 32 * 1024 * 1024  # safe on v5e/v6e/v7x; tiles below use << this


def _dot_nt(a, b):
    """a @ b.T (contract the last dim of both operands), f32 accumulation."""
    return lax.dot_general(a, b, (((1,), (1,)), ((), ())),
                           preferred_element_type=jnp.float32)


def _full(a):
    """BlockSpec for a small array kept whole & resident in VMEM."""
    nd = a.ndim
    return pl.BlockSpec(a.shape, lambda *_, nd=nd: (0,) * nd)


# --------------------------------------------------------------------------
# Kernel 1: MLP stack, tiled over node rows.  Also emits everything the
# aggregation kernels need: h, hg1^T = (h @ Wg1)^T, and ||h||^2 in both a
# column (n,1) and a row (1,n) layout (so no in-kernel relayouts later).
# --------------------------------------------------------------------------
def mlp_kernel(x_ref, w1_ref, b1_ref, w2_ref, b2_ref, w3_ref, b3_ref,
               wg1t_ref,
               h_ref, hg1t_ref, sq_ref, sqt_ref):
    x = x_ref[...]
    h = jnp.dot(x, w1_ref[...], preferred_element_type=jnp.float32) + b1_ref[...]
    h = jnp.maximum(h, 0.0)
    h = jnp.dot(h, w2_ref[...], preferred_element_type=jnp.float32) + b2_ref[...]
    h = jnp.maximum(h, 0.0)
    h = jnp.dot(h, w3_ref[...], preferred_element_type=jnp.float32) + b3_ref[...]  # (tm, 32)

    h_ref[...] = h
    hh = h * h
    sq_ref[...] = jnp.sum(hh, axis=1, keepdims=True)                      # (tm, 1)
    sqt_ref[...] = _dot_nt(jnp.ones((1, hh.shape[1]), jnp.float32), hh)   # (1, tm)
    hg1t_ref[...] = _dot_nt(wg1t_ref[...], h)                             # (16, tm) = (h @ Wg1)^T


# --------------------------------------------------------------------------
# Shared helper: build the (tj, ti) tile A[j_blk, i_blk] of the symmetric
# latent adjacency sigmoid(t * (cdist + theta)) from the node features.
# --------------------------------------------------------------------------
def _adj_tile(scal_ref, hi_ref, hj_ref, sqj_ref, sqti_ref):
    t = scal_ref[0]
    c = scal_ref[1]  # t * theta, folded in the wrapper
    gram = _dot_nt(hj_ref[...], hi_ref[...])                              # (tj, ti), f32
    d2 = jnp.maximum(sqj_ref[...] + sqti_ref[...] - 2.0 * gram, 0.0)
    z = t * jnp.sqrt(d2) + c
    e = jnp.exp(-z)                                                       # EUP
    return pl.reciprocal(1.0 + e, approx=True)                            # sigmoid(z)


# --------------------------------------------------------------------------
# Kernel 2: GraphConv1 aggregation (flash-style over column tiles) + the
# weight of GraphConv2 applied in the finalize, all in transposed layout.
# Output: hg2^T = (relu((A @ hg1)/n + bg1) @ Wg2)^T, shape (8, n).
# --------------------------------------------------------------------------
def gconv1_kernel(scal_ref, hi_ref, hj_ref, sqj_ref, sqti_ref, hg1t_ref,
                  bg1t_ref, wg2t_ref,
                  hg2t_ref, acc_ref):
    j = pl.program_id(1)

    @pl.when(j == 0)
    def _():
        acc_ref[...] = jnp.zeros_like(acc_ref)

    a_ji = _adj_tile(scal_ref, hi_ref, hj_ref, sqj_ref, sqti_ref)         # (tj, ti)
    acc_ref[...] += jnp.dot(hg1t_ref[...].astype(jnp.bfloat16),
                            a_ji.astype(jnp.bfloat16),
                            preferred_element_type=jnp.float32)           # (16, ti)

    @pl.when(j == pl.num_programs(1) - 1)
    def _():
        inv_n = scal_ref[2]
        h1t = jnp.maximum(acc_ref[...] * inv_n + bg1t_ref[...], 0.0)      # (16, ti)
        hg2t_ref[...] = jnp.dot(wg2t_ref[...], h1t,
                                preferred_element_type=jnp.float32)       # (8, ti)


# --------------------------------------------------------------------------
# Kernel 3: GraphConv2 aggregation (A recomputed from h, never spilled) with
# the lin1/relu/lin2 head fused into the finalize.  Output: logits^T (C, n).
# --------------------------------------------------------------------------
def gconv2_head_kernel(scal_ref, hi_ref, hj_ref, sqj_ref, sqti_ref, hg2t_ref,
                       bg2t_ref, wl1t_ref, bl1t_ref, wl2t_ref, bl2t_ref,
                       outt_ref, acc_ref):
    j = pl.program_id(1)

    @pl.when(j == 0)
    def _():
        acc_ref[...] = jnp.zeros_like(acc_ref)

    a_ji = _adj_tile(scal_ref, hi_ref, hj_ref, sqj_ref, sqti_ref)         # (tj, ti)
    acc_ref[...] += jnp.dot(hg2t_ref[...].astype(jnp.bfloat16),
                            a_ji.astype(jnp.bfloat16),
                            preferred_element_type=jnp.float32)           # (8, ti)

    @pl.when(j == pl.num_programs(1) - 1)
    def _():
        inv_n = scal_ref[2]
        h2t = jnp.maximum(acc_ref[...] * inv_n + bg2t_ref[...], 0.0)      # (8, ti)
        h3t = jnp.maximum(
            jnp.dot(wl1t_ref[...], h2t, preferred_element_type=jnp.float32)
            + bl1t_ref[...], 0.0)                                         # (16, ti)
        outt_ref[...] = (jnp.dot(wl2t_ref[...], h3t,
                                 preferred_element_type=jnp.float32)
                         + bl2t_ref[...])                                 # (C, ti)


# --------------------------------------------------------------------------
# Wrapper
# --------------------------------------------------------------------------
def dgraph_gat_forward(x, params, *, tile=128):
    n, in_feats = x.shape
    if n <= tile:
        tile = n
    assert n % tile == 0, "node count must be a multiple of the node tile"
    num_tiles = n // tile
    num_classes = params["wl2"].shape[1]
    f32 = jnp.float32

    # Pre-transposed weights / biases for the transposed-feature-layout stages.
    wg1t = params["wg1"].T            # (16, 32)
    wg2t = params["wg2"].T            # (8, 16)
    wl1t = params["wl1"].T            # (16, 8)
    wl2t = params["wl2"].T            # (C, 16)
    bg1t = params["bg1"].T            # (16, 1)
    bg2t = params["bg2"].T            # (8, 1)
    bl1t = params["bl1"].T            # (16, 1)
    bl2t = params["bl2"].T            # (C, 1)

    t = params["t"].reshape(())
    theta = params["theta"].reshape(())
    scal = jnp.stack([t, t * theta, jnp.asarray(1.0 / n, f32)]).astype(f32)  # (3,)

    # ---- stage 1: MLP over node-row tiles -------------------------------
    h, hg1t, sq, sqt = pl.pallas_call(
        mlp_kernel,
        out_shape=(
            jax.ShapeDtypeStruct((n, 32), f32),   # h
            jax.ShapeDtypeStruct((16, n), f32),   # hg1^T
            jax.ShapeDtypeStruct((n, 1), f32),    # ||h||^2 (column layout)
            jax.ShapeDtypeStruct((1, n), f32),    # ||h||^2 (row layout)
        ),
        grid=(num_tiles,),
        in_specs=[
            pl.BlockSpec((tile, in_feats), lambda i: (i, 0)),
            _full(params["w1"]), _full(params["b1"]),
            _full(params["w2"]), _full(params["b2"]),
            _full(params["w3"]), _full(params["b3"]),
            _full(wg1t),
        ],
        out_specs=(
            pl.BlockSpec((tile, 32), lambda i: (i, 0)),
            pl.BlockSpec((16, tile), lambda i: (0, i)),
            pl.BlockSpec((tile, 1), lambda i: (i, 0)),
            pl.BlockSpec((1, tile), lambda i: (0, i)),
        ),
        compiler_params=pltpu.CompilerParams(
            dimension_semantics=("parallel",),
            vmem_limit_bytes=VMEM_LIMIT),
    )(x, params["w1"], params["b1"], params["w2"], params["b2"],
      params["w3"], params["b3"], wg1t)

    # ---- shared specs for the flash-style aggregation kernels -----------
    smem_spec = pl.BlockSpec(memory_space=pltpu.MemorySpace.SMEM)
    hi_spec = pl.BlockSpec((tile, 32), lambda i, j: (i, 0))
    hj_spec = pl.BlockSpec((tile, 32), lambda i, j: (j, 0))
    sqj_spec = pl.BlockSpec((tile, 1), lambda i, j: (j, 0))
    sqti_spec = pl.BlockSpec((1, tile), lambda i, j: (0, i))
    agg_cparams = pltpu.CompilerParams(
        dimension_semantics=("parallel", "arbitrary"),
        vmem_limit_bytes=VMEM_LIMIT)

    # ---- stage 2: GraphConv1 aggregation (+ Wg2 applied in finalize) ----
    hg2t = pl.pallas_call(
        gconv1_kernel,
        out_shape=jax.ShapeDtypeStruct((8, n), f32),
        grid=(num_tiles, num_tiles),
        in_specs=[
            smem_spec, hi_spec, hj_spec, sqj_spec, sqti_spec,
            pl.BlockSpec((16, tile), lambda i, j: (0, j)),    # hg1^T column tiles
            _full(bg1t), _full(wg2t),
        ],
        out_specs=pl.BlockSpec((8, tile), lambda i, j: (0, i)),
        scratch_shapes=[pltpu.VMEM((16, tile), f32)],
        compiler_params=agg_cparams,
    )(scal, h, h, sq, sqt, hg1t, bg1t, wg2t)

    # ---- stage 3: GraphConv2 aggregation (A recomputed) + MLP head ------
    outt = pl.pallas_call(
        gconv2_head_kernel,
        out_shape=jax.ShapeDtypeStruct((num_classes, n), f32),
        grid=(num_tiles, num_tiles),
        in_specs=[
            smem_spec, hi_spec, hj_spec, sqj_spec, sqti_spec,
            pl.BlockSpec((8, tile), lambda i, j: (0, j)),     # hg2^T column tiles
            _full(bg2t), _full(wl1t), _full(bl1t), _full(wl2t), _full(bl2t),
        ],
        out_specs=pl.BlockSpec((num_classes, tile), lambda i, j: (0, i)),
        scratch_shapes=[pltpu.VMEM((8, tile), f32)],
        compiler_params=agg_cparams,
    )(scal, h, h, sq, sqt, hg2t, bg2t, wl1t, bl1t, wl2t, bl2t)

    return outt.T  # (n, num_classes)


# --------------------------------------------------------------------------
# Pure-JAX reference (f32, un-tiled) for a sanity check
# --------------------------------------------------------------------------
def dgraph_gat_reference(x, params):
    n = x.shape[0]
    h = jax.nn.relu(x @ params["w1"] + params["b1"])
    h = jax.nn.relu(h @ params["w2"] + params["b2"])
    h = h @ params["w3"] + params["b3"]
    sq = jnp.sum(h * h, axis=1, keepdims=True)
    d2 = jnp.maximum(sq + sq.T - 2.0 * (h @ h.T), 0.0)
    A = jax.nn.sigmoid(params["t"][0, 0] * (jnp.sqrt(d2) + params["theta"][0, 0]))
    h = jax.nn.relu((A @ (h @ params["wg1"])) / n + params["bg1"])
    h = jax.nn.relu((A @ (h @ params["wg2"])) / n + params["bg2"])
    h = jax.nn.relu(h @ params["wl1"] + params["bl1"])
    return h @ params["wl2"] + params["bl2"]


# --------------------------------------------------------------------------
# Parameter init (xavier for weights, matching the PyTorch module layout;
# nn.Linear weights are stored pre-transposed as (in, out)).
# --------------------------------------------------------------------------
def xavier_uniform(key, shape):
    fan_in, fan_out = shape[0], shape[1]
    bound = (6.0 / (fan_in + fan_out)) ** 0.5
    return jax.random.uniform(key, shape, jnp.float32, -bound, bound)


def init_params(key, in_feats, h_feats, num_classes):
    ks = jax.random.split(key, 16)
    p = {}
    p["w1"] = xavier_uniform(ks[0], (in_feats, h_feats))
    p["b1"] = jax.random.uniform(ks[1], (1, h_feats), jnp.float32, -0.1, 0.1)
    p["w2"] = xavier_uniform(ks[2], (h_feats, h_feats))
    p["b2"] = jax.random.uniform(ks[3], (1, h_feats), jnp.float32, -0.1, 0.1)
    p["w3"] = xavier_uniform(ks[4], (h_feats, 32))
    p["b3"] = jax.random.uniform(ks[5], (1, 32), jnp.float32, -0.1, 0.1)
    p["t"] = xavier_uniform(ks[6], (1, 1))
    p["theta"] = xavier_uniform(ks[7], (1, 1))
    p["wg1"] = xavier_uniform(ks[8], (32, 16))
    p["bg1"] = jnp.zeros((1, 16), jnp.float32)
    p["wg2"] = xavier_uniform(ks[9], (16, 8))
    p["bg2"] = jnp.zeros((1, 8), jnp.float32)
    p["wl1"] = xavier_uniform(ks[10], (8, 16))
    p["bl1"] = jax.random.uniform(ks[11], (1, 16), jnp.float32, -0.1, 0.1)
    p["wl2"] = xavier_uniform(ks[12], (16, num_classes))
    p["bl2"] = jax.random.uniform(ks[13], (1, num_classes), jnp.float32, -0.1, 0.1)
    return p


if __name__ == "__main__":
    # Small but tiling-exercising shapes: 256 nodes -> 2x2 adjacency tiles.
    n, in_feats, h_feats, num_classes = 256, 16, 32, 4

    key = jax.random.PRNGKey(0)
    k_x, k_p = jax.random.split(key)
    x = jax.random.normal(k_x, (n, in_feats), jnp.float32)
    params = init_params(k_p, in_feats, h_feats, num_classes)

    out = dgraph_gat_forward(x, params)
    out = jax.block_until_ready(out)
    assert out.shape == (n, num_classes)
    assert bool(jnp.all(jnp.isfinite(out)))

    # Loose-tolerance check vs the f32 reference (kernel uses bf16 aggregation
    # matmuls + approximate-reciprocal sigmoid, so expect ~1% deviations).
    ref = dgraph_gat_reference(x, params)
    err = float(jnp.max(jnp.abs(out - ref)))
    tol = 0.1 * (1.0 + float(jnp.max(jnp.abs(ref))))
    assert err < tol, f"kernel/reference mismatch: {err} >= {tol}"

    print("KERNEL_OK")
</pallas_src>

<mosaic_0001>
module attributes {stable_mosaic.version = 11 : i64} {
  func.func @mlp_kernel(%arg0: i32, %arg1: memref<128x16xf32, #tpu.memory_space<vmem>>, %arg2: memref<16x32xf32, #tpu.memory_space<vmem>>, %arg3: memref<1x32xf32, #tpu.memory_space<vmem>>, %arg4: memref<32x32xf32, #tpu.memory_space<vmem>>, %arg5: memref<1x32xf32, #tpu.memory_space<vmem>>, %arg6: memref<32x32xf32, #tpu.memory_space<vmem>>, %arg7: memref<1x32xf32, #tpu.memory_space<vmem>>, %arg8: memref<16x32xf32, #tpu.memory_space<vmem>>, %arg9: memref<128x32xf32, #tpu.memory_space<vmem>>, %arg10: memref<16x128xf32, #tpu.memory_space<vmem>>, %arg11: memref<128x1xf32, #tpu.memory_space<vmem>>, %arg12: memref<1x128xf32, #tpu.memory_space<vmem>>) attributes {dimension_semantics = [#tpu.dimension_semantics<parallel>], iteration_bounds = array<i64: 2>, scalar_prefetch = 0 : i64, scratch_operands = 0 : i64, tpu.core_type = #tpu.core_type<tc>, window_params = [{transform_indices = @transform_0, window_bounds = array<i64: 128, 16>}, {pipeline_mode = #tpu.pipeline_mode<synchronous>, transform_indices = @transform_1, window_bounds = array<i64: 16, 32>}, {pipeline_mode = #tpu.pipeline_mode<synchronous>, transform_indices = @transform_2, window_bounds = array<i64: 1, 32>}, {pipeline_mode = #tpu.pipeline_mode<synchronous>, transform_indices = @transform_3, window_bounds = array<i64: 32, 32>}, {pipeline_mode = #tpu.pipeline_mode<synchronous>, transform_indices = @transform_4, window_bounds = array<i64: 1, 32>}, {pipeline_mode = #tpu.pipeline_mode<synchronous>, transform_indices = @transform_5, window_bounds = array<i64: 32, 32>}, {pipeline_mode = #tpu.pipeline_mode<synchronous>, transform_indices = @transform_6, window_bounds = array<i64: 1, 32>}, {pipeline_mode = #tpu.pipeline_mode<synchronous>, transform_indices = @transform_7, window_bounds = array<i64: 16, 32>}, {transform_indices = @transform_8, window_bounds = array<i64: 128, 32>}, {transform_indices = @transform_9, window_bounds = array<i64: 16, 128>}, {transform_indices = @transform_10, window_bounds = array<i64: 128, 1>}, {transform_indices = @transform_11, window_bounds = array<i64: 1, 128>}]} {
    %c0 = arith.constant 0 : index
    %c0_0 = arith.constant 0 : index
    %0 = vector.load %arg1[%c0, %c0_0] : memref<128x16xf32, #tpu.memory_space<vmem>>, vector<128x16xf32>
    %c0_1 = arith.constant 0 : index
    %c0_2 = arith.constant 0 : index
    %1 = vector.load %arg2[%c0_1, %c0_2] : memref<16x32xf32, #tpu.memory_space<vmem>>, vector<16x32xf32>
    %cst = arith.constant dense<0.000000e+00> : vector<128x32xf32>
    %2 = tpu.matmul %0, %1, %cst {dimension_numbers = #tpu.dot_dimension_numbers<[1], [0], [0], [1], [0, 0, 1, 1], [], []>} : vector<128x16xf32>, vector<16x32xf32>, vector<128x32xf32> -> vector<128x32xf32>
    %c0_3 = arith.constant 0 : index
    %c0_4 = arith.constant 0 : index
    %3 = vector.load %arg3[%c0_3, %c0_4] : memref<1x32xf32, #tpu.memory_space<vmem>>, vector<1x32xf32>
    %4 = vector.broadcast %3 : vector<1x32xf32> to vector<128x32xf32>
    %5 = arith.addf %2, %4 : vector<128x32xf32>
    %cst_5 = arith.constant 0.000000e+00 : f32
    %6 = vector.broadcast %cst_5 : f32 to vector<128x32xf32>
    %7 = arith.maximumf %5, %6 : vector<128x32xf32>
    %c0_6 = arith.constant 0 : index
    %c0_7 = arith.constant 0 : index
    %8 = vector.load %arg4[%c0_6, %c0_7] : memref<32x32xf32, #tpu.memory_space<vmem>>, vector<32x32xf32>
    %cst_8 = arith.constant dense<0.000000e+00> : vector<128x32xf32>
    %9 = tpu.matmul %7, %8, %cst_8 {dimension_numbers = #tpu.dot_dimension_numbers<[1], [0], [0], [1], [0, 0, 1, 1], [], []>} : vector<128x32xf32>, vector<32x32xf32>, vector<128x32xf32> -> vector<128x32xf32>
    %c0_9 = arith.constant 0 : index
    %c0_10 = arith.constant 0 : index
    %10 = vector.load %arg5[%c0_9, %c0_10] : memref<1x32xf32, #tpu.memory_space<vmem>>, vector<1x32xf32>
    %11 = vector.broadcast %10 : vector<1x32xf32> to vector<128x32xf32>
    %12 = arith.addf %9, %11 : vector<128x32xf32>
    %cst_11 = arith.constant 0.000000e+00 : f32
    %13 = vector.broadcast %cst_11 : f32 to vector<128x32xf32>
    %14 = arith.maximumf %12, %13 : vector<128x32xf32>
    %c0_12 = arith.constant 0 : index
    %c0_13 = arith.constant 0 : index
    %15 = vector.load %arg6[%c0_12, %c0_13] : memref<32x32xf32, #tpu.memory_space<vmem>>, vector<32x32xf32>
    %cst_14 = arith.constant dense<0.000000e+00> : vector<128x32xf32>
    %16 = tpu.matmul %14, %15, %cst_14 {dimension_numbers = #tpu.dot_dimension_numbers<[1], [0], [0], [1], [0, 0, 1, 1], [], []>} : vector<128x32xf32>, vector<32x32xf32>, vector<128x32xf32> -> vector<128x32xf32>
    %c0_15 = arith.constant 0 : index
    %c0_16 = arith.constant 0 : index
    %17 = vector.load %arg7[%c0_15, %c0_16] : memref<1x32xf32, #tpu.memory_space<vmem>>, vector<1x32xf32>
    %18 = vector.broadcast %17 : vector<1x32xf32> to vector<128x32xf32>
    %19 = arith.addf %16, %18 : vector<128x32xf32>
    %c0_17 = arith.constant 0 : index
    %c0_18 = arith.constant 0 : index
    %20 = vector.load %arg9[%c0_17, %c0_18] : memref<128x32xf32, #tpu.memory_space<vmem>>, vector<128x32xf32>
    tpu.vector_store %arg9[%c0_17, %c0_18], %19 {strides = array<i32>} : memref<128x32xf32, #tpu.memory_space<vmem>>, vector<128x32xf32>,
    %21 = arith.mulf %19, %19 : vector<128x32xf32>
    %cst_19 = arith.constant dense<0.000000e+00> : vector<128xf32>
    %22 = vector.multi_reduction <add>, %21, %cst_19 [1] : vector<128x32xf32> to vector<128xf32>
    %23 = vector.shape_cast %22 : vector<128xf32> to vector<128x1xf32>
    %c0_20 = arith.constant 0 : index
    %c0_21 = arith.constant 0 : index
    %24 = vector.load %arg11[%c0_20, %c0_21] : memref<128x1xf32, #tpu.memory_space<vmem>>, vector<128x1xf32>
    tpu.vector_store %arg11[%c0_20, %c0_21], %23 {strides = array<i32>} : memref<128x1xf32, #tpu.memory_space<vmem>>, vector<128x1xf32>,
    %cst_22 = arith.constant 1.000000e+00 : f32
    %25 = vector.broadcast %cst_22 : f32 to vector<1x32xf32>
    %cst_23 = arith.constant dense<0.000000e+00> : vector<1x128xf32>
    %26 = tpu.matmul %25, %21, %cst_23 {dimension_numbers = #tpu.dot_dimension_numbers<[1], [1], [0], [0], [0, 0, 1, 0], [], []>} : vector<1x32xf32>, vector<128x32xf32>, vector<1x128xf32> -> vector<1x128xf32>
    %c0_24 = arith.constant 0 : index
    %c0_25 = arith.constant 0 : index
    %27 = vector.load %arg12[%c0_24, %c0_25] : memref<1x128xf32, #tpu.memory_space<vmem>>, vector<1x128xf32>
    tpu.vector_store %arg12[%c0_24, %c0_25], %26 {strides = array<i32>} : memref<1x128xf32, #tpu.memory_space<vmem>>, vector<1x128xf32>,
    %c0_26 = arith.constant 0 : index
    %c0_27 = arith.constant 0 : index
    %28 = vector.load %arg8[%c0_26, %c0_27] : memref<16x32xf32, #tpu.memory_space<vmem>>, vector<16x32xf32>
    %cst_28 = arith.constant dense<0.000000e+00> : vector<16x128xf32>
    %29 = tpu.matmul %28, %19, %cst_28 {dimension_numbers = #tpu.dot_dimension_numbers<[1], [1], [0], [0], [0, 0, 1, 0], [], []>} : vector<16x32xf32>, vector<128x32xf32>, vector<16x128xf32> -> vector<16x128xf32>
    %c0_29 = arith.constant 0 : index
    %c0_30 = arith.constant 0 : index
    %30 = vector.load %arg10[%c0_29, %c0_30] : memref<16x128xf32, #tpu.memory_space<vmem>>, vector<16x128xf32>
    tpu.vector_store %arg10[%c0_29, %c0_30], %29 {strides = array<i32>} : memref<16x128xf32, #tpu.memory_space<vmem>>, vector<16x128xf32>,
    return
  }
  func.func @transform_0(%arg0: i32) -> (i32, i32) {
    %c0_i32 = arith.constant 0 : i32
    %c0_i32_0 = arith.constant 0 : i32
    return %arg0, %c0_i32 : i32, i32
  }
  func.func @transform_1(%arg0: i32) -> (i32, i32) {
    %c0_i32 = arith.constant 0 : i32
    %c0_i32_0 = arith.constant 0 : i32
    %c0_i32_1 = arith.constant 0 : i32
    return %c0_i32, %c0_i32_0 : i32, i32
  }
  func.func @transform_2(%arg0: i32) -> (i32, i32) {
    %c0_i32 = arith.constant 0 : i32
    %c0_i32_0 = arith.constant 0 : i32
    %c0_i32_1 = arith.constant 0 : i32
    return %c0_i32, %c0_i32_0 : i32, i32
  }
  func.func @transform_3(%arg0: i32) -> (i32, i32) {
    %c0_i32 = arith.constant 0 : i32
    %c0_i32_0 = arith.constant 0 : i32
    %c0_i32_1 = arith.constant 0 : i32
    return %c0_i32, %c0_i32_0 : i32, i32
  }
  func.func @transform_4(%arg0: i32) -> (i32, i32) {
    %c0_i32 = arith.constant 0 : i32
    %c0_i32_0 = arith.constant 0 : i32
    %c0_i32_1 = arith.constant 0 : i32
    return %c0_i32, %c0_i32_0 : i32, i32
  }
  func.func @transform_5(%arg0: i32) -> (i32, i32) {
    %c0_i32 = arith.constant 0 : i32
    %c0_i32_0 = arith.constant 0 : i32
    %c0_i32_1 = arith.constant 0 : i32
    return %c0_i32, %c0_i32_0 : i32, i32
  }
  func.func @transform_6(%arg0: i32) -> (i32, i32) {
    %c0_i32 = arith.constant 0 : i32
    %c0_i32_0 = arith.constant 0 : i32
    %c0_i32_1 = arith.constant 0 : i32
    return %c0_i32, %c0_i32_0 : i32, i32
  }
  func.func @transform_7(%arg0: i32) -> (i32, i32) {
    %c0_i32 = arith.constant 0 : i32
    %c0_i32_0 = arith.constant 0 : i32
    %c0_i32_1 = arith.constant 0 : i32
    return %c0_i32, %c0_i32_0 : i32, i32
  }
  func.func @transform_8(%arg0: i32) -> (i32, i32) {
    %c0_i32 = arith.constant 0 : i32
    %c0_i32_0 = arith.constant 0 : i32
    return %arg0, %c0_i32 : i32, i32
  }
  func.func @transform_9(%arg0: i32) -> (i32, i32) {
    %c0_i32 = arith.constant 0 : i32
    %c0_i32_0 = arith.constant 0 : i32
    return %c0_i32, %arg0 : i32, i32
  }
  func.func @transform_10(%arg0: i32) -> (i32, i32) {
    %c0_i32 = arith.constant 0 : i32
    %c0_i32_0 = arith.constant 0 : i32
    return %arg0, %c0_i32 : i32, i32
  }
  func.func @transform_11(%arg0: i32) -> (i32, i32) {
    %c0_i32 = arith.constant 0 : i32
    %c0_i32_0 = arith.constant 0 : i32
    return %c0_i32, %arg0 : i32, i32
  }
}

</mosaic_0001>

<llo_original>
// kernel: tpu_custom_call.1
$region0: #{tpu_custom_call.1}
  #allocation0 [shape = 'u32[]', space=smem, size = 0x4, offset = 0x4, fixed_abs, tag = 'smem constant byte address 0x4 - core index']
  #allocation1 [shape = 'u32[144,128]{1,0:T(1,128)}', space=vmem, size = 0x12000, scoped, tag = 'internal scratch']
  %s0 = inlined_call_operand.vmem [shape: f32[256,16], index: 0, kind: input, shape index: {}]
  %s1 = inlined_call_operand.vmem [shape: f32[16,32], index: 1, kind: input, shape index: {}]
  %s2 = inlined_call_operand.vmem [shape: f32[1,32], index: 2, kind: input, shape index: {}]
  %s3 = inlined_call_operand.vmem [shape: f32[32,32], index: 3, kind: input, shape index: {}]
  %s4 = inlined_call_operand.vmem [shape: f32[1,32], index: 4, kind: input, shape index: {}]
  %s5 = inlined_call_operand.vmem [shape: f32[32,32], index: 5, kind: input, shape index: {}]
  %s6 = inlined_call_operand.vmem [shape: f32[1,32], index: 6, kind: input, shape index: {}]
  %s7 = inlined_call_operand.vmem [shape: f32[16,32], index: 7, kind: input, shape index: {}]
  %s8 = inlined_call_operand.vmem [shape: f32[256,32], index: 8, kind: output, shape index: {0}]
  %s9 = inlined_call_operand.hbm [shape: f32[16,256], index: 9, kind: output, shape index: {1}]
  %s10 = inlined_call_operand.vmem [shape: f32[256,1], index: 10, kind: output, shape index: {2}]
  %s11 = inlined_call_operand.hbm [shape: f32[1,256], index: 11, kind: output, shape index: {3}]
  %12 = xla_tuple %s8, %s9, %s10, %s11
  %s13 = sld [smem:[#allocation0]]
  $region89: #{tpu_custom_call.1} parent=0
    _
  %s15 = ssub.s32 1, %s13
  %s16 = scalar_select 0, %s15, %s13
  $region1: #{tpu_custom_call.1} parent=0
    #allocation2 [shape = 'u8[16384]{0}', space=vmem, size = 0x4000, scoped, tag = 'output window, operand 1']
    #allocation3 [shape = 's32[2]{0}', space=sflag, size = 0x8, scoped, tag = 'scoped memory for tpu_custom_call.1']
    #allocation4 [shape = 'u8[1024]{0}', space=vmem, size = 0x400, scoped, tag = 'output window, operand 3']
    #allocation5 [shape = 's32[2]{0}', space=sflag, size = 0x8, scoped, tag = 'scoped memory for tpu_custom_call.1']
    %17 = vsyncpa [#allocation3], 0
    %s18 = scalar_lea.sflag [#allocation3], 1
    %19 = vsyncpa %s18, 0
    %20 = vsyncpa [#allocation5], 0
    %s21 = scalar_lea.sflag [#allocation5], 1
    %22 = vsyncpa %s21, 0
    loop: start=0, step=1, limit=4
    $region2: #{tpu_custom_call.1} parent=1 // loop_pre_header
      _
    $region3: #{tpu_custom_call.1} parent=1 // loop_header
      %s24 = sphi 0, %s28
      %p25 = scmp.ge.s32.totalorder %s24, 4
      %s34 = sphi 0, %s36
      %s37 = sphi 0, %s34
      %s38 = sphi 0, %s37
      %s54 = sphi 0, %s38
      %s58 = sphi 0, %s58
      %s60 = sphi 0, %s58
      %s61 = sphi 0, %s60
      %s75 = sphi 0, %s61
      %s79 = sphi 0, %s79
      %s81 = sphi 0, %s79
      %s82 = sphi 0, %s81
      %s96 = sphi 0, %s82
      %s100 = sphi 0, %s100
      %s102 = sphi 0, %s100
      %s103 = sphi 0, %s102
      %s117 = sphi 0, %s103
      %s121 = sphi 0, %s121
      %s123 = sphi 0, %s121
      %s124 = sphi 0, %s123
      %s138 = sphi 0, %s124
      %s142 = sphi 0, %s142
      %s144 = sphi 0, %s142
      %s145 = sphi 0, %s144
      %s159 = sphi 0, %s145
      %s163 = sphi 0, %s163
      %s165 = sphi 0, %s163
      %s166 = sphi 0, %s165
      %s180 = sphi 0, %s166
      %s184 = sphi 0, %s184
      %s186 = sphi 0, %s184
      %s187 = sphi 0, %s186
      %s201 = sphi 0, %s187
      %s207 = sphi 0, %s209
      %s210 = sphi 0, %s207
      %s211 = sphi 0, %s210
      %s227 = sphi 0, %s211
      %s233 = sphi 0, %s235
      %s236 = sphi 0, %s233
      %s237 = sphi 0, %s236
      %s253 = sphi 0, %s237
      %s259 = sphi 0, %s261
      %s262 = sphi 0, %s259
      %s263 = sphi 0, %s262
      %s279 = sphi 0, %s263
      %s285 = sphi 0, %s287
      %s288 = sphi 0, %s285
      %s289 = sphi 0, %s288
      %s305 = sphi 0, %s289
    $region4: #{tpu_custom_call.1} parent=1 // loop_header_branch
      %27 = sbr.rel (%p25) target = $region8
    $region5: #{tpu_custom_call.1} parent=1 // loop_body
      %s29 = ssub.s32 %s24, 1
      %s30 = ssub.s32 %s24, 2
      %s31 = sadd.s32 %s24, 1
      %s32 = ssub.s32 %s24, %s31
      %p33 = scmp.eq.s32.totalorder %s32, 0
      %s35 = sadd.s32 %s34, 1
      %s36 = scalar_select %p33, %s34, %s35
      %p39 = pneg %p33
      %p40 = scmp.eq.s32.totalorder %s24, 1
      %p41 = por %p39, %p40
      %p42 = scmp.ne.s32.totalorder %s34, %s37
      %p43 = scmp.eq.s32.totalorder %s24, 0
      %p44 = por %p42, %p43
      %p45 = scmp.ne.s32.totalorder %s34, %s37
      %p46 = scmp.eq.s32.totalorder %s29, 1
      %p47 = por %p45, %p46
      %p48 = scmp.ne.s32.totalorder %s37, %s38
      %p49 = scmp.eq.s32.totalorder %s29, 0
      %p50 = por %p48, %p49
      %p51 = scmp.ne.s32.totalorder %s37, %s38
      %p52 = scmp.eq.s32.totalorder %s30, 1
      %p53 = por %p51, %p52
      %p55 = scmp.ne.s32.totalorder %s38, %s54
      %p56 = scmp.eq.s32.totalorder %s30, 0
      %p57 = por %p55, %p56
      %s59 = sadd.s32 %s58, 1
      %p62 = scmp.eq.s32.totalorder %s24, 1
      %p63 = scmp.ne.s32.totalorder %s58, %s60
      %p64 = scmp.eq.s32.totalorder %s24, 0
      %p65 = por %p63, %p64
      %p66 = scmp.ne.s32.totalorder %s58, %s60
      %p67 = scmp.eq.s32.totalorder %s29, 1
      %p68 = por %p66, %p67
      %p69 = scmp.ne.s32.totalorder %s60, %s61
      %p70 = scmp.eq.s32.totalorder %s29, 0
      %p71 = por %p69, %p70
      %p72 = scmp.ne.s32.totalorder %s60, %s61
      %p73 = scmp.eq.s32.totalorder %s30, 1
      %p74 = por %p72, %p73
      %p76 = scmp.ne.s32.totalorder %s61, %s75
      %p77 = scmp.eq.s32.totalorder %s30, 0
      %p78 = por %p76, %p77
      %s80 = sadd.s32 %s79, 1
      %p83 = scmp.eq.s32.totalorder %s24, 1
      %p84 = scmp.ne.s32.totalorder %s79, %s81
      %p85 = scmp.eq.s32.totalorder %s24, 0
      %p86 = por %p84, %p85
      %p87 = scmp.ne.s32.totalorder %s79, %s81
      %p88 = scmp.eq.s32.totalorder %s29, 1
      %p89 = por %p87, %p88
      %p90 = scmp.ne.s32.totalorder %s81, %s82
      %p91 = scmp.eq.s32.totalorder %s29, 0
      %p92 = por %p90, %p91
      %p93 = scmp.ne.s32.totalorder %s81, %s82
      %p94 = scmp.eq.s32.totalorder %s30, 1
      %p95 = por %p93, %p94
      %p97 = scmp.ne.s32.totalorder %s82, %s96
      %p98 = scmp.eq.s32.totalorder %s30, 0
      %p99 = por %p97, %p98
      %s101 = sadd.s32 %s100, 1
      %p104 = scmp.eq.s32.totalorder %s24, 1
      %p105 = scmp.ne.s32.totalorder %s100, %s102
      %p106 = scmp.eq.s32.totalorder %s24, 0
      %p107 = por %p105, %p106
      %p108 = scmp.ne.s32.totalorder %s100, %s102
      %p109 = scmp.eq.s32.totalorder %s29, 1
      %p110 = por %p108, %p109
      %p111 = scmp.ne.s32.totalorder %s102, %s103
      %p112 = scmp.eq.s32.totalorder %s29, 0
      %p113 = por %p111, %p112
      %p114 = scmp.ne.s32.totalorder %s102, %s103
      %p115 = scmp.eq.s32.totalorder %s30, 1
      %p116 = por %p114, %p115
      %p118 = scmp.ne.s32.totalorder %s103, %s117
      %p119 = scmp.eq.s32.totalorder %s30, 0
      %p120 = por %p118, %p119
      %s122 = sadd.s32 %s121, 1
      %p125 = scmp.eq.s32.totalorder %s24, 1
      %p126 = scmp.ne.s32.totalorder %s121, %s123
      %p127 = scmp.eq.s32.totalorder %s24, 0
      %p128 = por %p126, %p127
      %p129 = scmp.ne.s32.totalorder %s121, %s123
      %p130 = scmp.eq.s32.totalorder %s29, 1
      %p131 = por %p129, %p130
      %p132 = scmp.ne.s32.totalorder %s123, %s124
      %p133 = scmp.eq.s32.totalorder %s29, 0
      %p134 = por %p132, %p133
      %p135 = scmp.ne.s32.totalorder %s123, %s124
      %p136 = scmp.eq.s32.totalorder %s30, 1
      %p137 = por %p135, %p136
      %p139 = scmp.ne.s32.totalorder %s124, %s138
      %p140 = scmp.eq.s32.totalorder %s30, 0
      %p141 = por %p139, %p140
      %s143 = sadd.s32 %s142, 1
      %p146 = scmp.eq.s32.totalorder %s24, 1
      %p147 = scmp.ne.s32.totalorder %s142, %s144
      %p148 = scmp.eq.s32.totalorder %s24, 0
      %p149 = por %p147, %p148
      %p150 = scmp.ne.s32.totalorder %s142, %s144
      %p151 = scmp.eq.s32.totalorder %s29, 1
      %p152 = por %p150, %p151
      %p153 = scmp.ne.s32.totalorder %s144, %s145
      %p154 = scmp.eq.s32.totalorder %s29, 0
      %p155 = por %p153, %p154
      %p156 = scmp.ne.s32.totalorder %s144, %s145
      %p157 = scmp.eq.s32.totalorder %s30, 1
      %p158 = por %p156, %p157
      %p160 = scmp.ne.s32.totalorder %s145, %s159
      %p161 = scmp.eq.s32.totalorder %s30, 0
      %p162 = por %p160, %p161
      %s164 = sadd.s32 %s163, 1
      %p167 = scmp.eq.s32.totalorder %s24, 1
      %p168 = scmp.ne.s32.totalorder %s163, %s165
      %p169 = scmp.eq.s32.totalorder %s24, 0
      %p170 = por %p168, %p169
      %p171 = scmp.ne.s32.totalorder %s163, %s165
      %p172 = scmp.eq.s32.totalorder %s29, 1
      %p173 = por %p171, %p172
      %p174 = scmp.ne.s32.totalorder %s165, %s166
      %p175 = scmp.eq.s32.totalorder %s29, 0
      %p176 = por %p174, %p175
      %p177 = scmp.ne.s32.totalorder %s165, %s166
      %p178 = scmp.eq.s32.totalorder %s30, 1
      %p179 = por %p177, %p178
      %p181 = scmp.ne.s32.totalorder %s166, %s180
      %p182 = scmp.eq.s32.totalorder %s30, 0
      %p183 = por %p181, %p182
      %s185 = sadd.s32 %s184, 1
      %p188 = scmp.eq.s32.totalorder %s24, 1
      %p189 = scmp.ne.s32.totalorder %s184, %s186
      %p190 = scmp.eq.s32.totalorder %s24, 0
      %p191 = por %p189, %p190
      %p192 = scmp.ne.s32.totalorder %s184, %s186
      %p193 = scmp.eq.s32.totalorder %s29, 1
      %p194 = por %p192, %p193
      %p195 = scmp.ne.s32.totalorder %s186, %s187
      %p196 = scmp.eq.s32.totalorder %s29, 0
      %p197 = por %p195, %p196
      %p198 = scmp.ne.s32.totalorder %s186, %s187
      %p199 = scmp.eq.s32.totalorder %s30, 1
      %p200 = por %p198, %p199
      %p202 = scmp.ne.s32.totalorder %s187, %s201
      %p203 = scmp.eq.s32.totalorder %s30, 0
      %p204 = por %p202, %p203
      %s205 = ssub.s32 %s24, %s31
      %p206 = scmp.eq.s32.totalorder %s205, 0
      %s208 = sadd.s32 %s207, 1
      %s209 = scalar_select %p206, %s207, %s208
      %p212 = pneg %p206
      %p213 = scmp.eq.s32.totalorder %s24, 1
      %p214 = por %p212, %p213
      %p215 = scmp.ne.s32.totalorder %s207, %s210
      %p216 = scmp.eq.s32.totalorder %s24, 0
      %p217 = por %p215, %p216
      %p218 = scmp.ne.s32.totalorder %s207, %s210
      %p219 = scmp.eq.s32.totalorder %s29, 1
      %p220 = por %p218, %p219
      %p221 = scmp.ne.s32.totalorder %s210, %s211
      %p222 = scmp.eq.s32.totalorder %s29, 0
      %p223 = por %p221, %p222
      %p224 = scmp.ne.s32.totalorder %s210, %s211
      %p225 = scmp.eq.s32.totalorder %s30, 1
      %p226 = por %p224, %p225
      %p228 = scmp.ne.s32.totalorder %s211, %s227
      %p229 = scmp.eq.s32.totalorder %s30, 0
      %p230 = por %p228, %p229
      %s231 = ssub.s32 %s24, %s31
      %p232 = scmp.eq.s32.totalorder %s231, 0
      %s234 = sadd.s32 %s233, 1
      %s235 = scalar_select %p232, %s233, %s234
      %p238 = pneg %p232
      %p239 = scmp.eq.s32.totalorder %s24, 1
      %p240 = por %p238, %p239
      %p241 = scmp.ne.s32.totalorder %s233, %s236
      %p242 = scmp.eq.s32.totalorder %s24, 0
      %p243 = por %p241, %p242
      %p244 = scmp.ne.s32.totalorder %s233, %s236
      %p245 = scmp.eq.s32.totalorder %s29, 1
      %p246 = por %p244, %p245
      %p247 = scmp.ne.s32.totalorder %s236, %s237
      %p248 = scmp.eq.s32.totalorder %s29, 0
      %p249 = por %p247, %p248
      %p250 = scmp.ne.s32.totalorder %s236, %s237
      %p251 = scmp.eq.s32.totalorder %s30, 1
      %p252 = por %p250, %p251
      %p254 = scmp.ne.s32.totalorder %s237, %s253
      %p255 = scmp.eq.s32.totalorder %s30, 0
      %p256 = por %p254, %p255
      %s257 = ssub.s32 %s24, %s31
      %p258 = scmp.eq.s32.totalorder %s257, 0
      %s260 = sadd.s32 %s259, 1
      %s261 = scalar_select %p258, %s259, %s260
      %p264 = pneg %p258
      %p265 = scmp.eq.s32.totalorder %s24, 1
      %p266 = por %p264, %p265
      %p267 = scmp.ne.s32.totalorder %s259, %s262
      %p268 = scmp.eq.s32.totalorder %s24, 0
      %p269 = por %p267, %p268
      %p270 = scmp.ne.s32.totalorder %s259, %s262
      %p271 = scmp.eq.s32.totalorder %s29, 1
      %p272 = por %p270, %p271
      %p273 = scmp.ne.s32.totalorder %s262, %s263
      %p274 = scmp.eq.s32.totalorder %s29, 0
      %p275 = por %p273, %p274
      %p276 = scmp.ne.s32.totalorder %s262, %s263
      %p277 = scmp.eq.s32.totalorder %s30, 1
      %p278 = por %p276, %p277
      %p280 = scmp.ne.s32.totalorder %s263, %s279
      %p281 = scmp.eq.s32.totalorder %s30, 0
      %p282 = por %p280, %p281
      %s283 = ssub.s32 %s24, %s31
      %p284 = scmp.eq.s32.totalorder %s283, 0
      %s286 = sadd.s32 %s285, 1
      %s287 = scalar_select %p284, %s285, %s286
      %p290 = pneg %p284
      %p291 = scmp.eq.s32.totalorder %s24, 1
      %p292 = por %p290, %p291
      %p293 = scmp.ne.s32.totalorder %s285, %s288
      %p294 = scmp.eq.s32.totalorder %s24, 0
      %p295 = por %p293, %p294
      %p296 = scmp.ne.s32.totalorder %s285, %s288
      %p297 = scmp.eq.s32.totalorder %s29, 1
      %p298 = por %p296, %p297
      %p299 = scmp.ne.s32.totalorder %s288, %s289
      %p300 = scmp.eq.s32.totalorder %s29, 0
      %p301 = por %p299, %p300
      %p302 = scmp.ne.s32.totalorder %s288, %s289
      %p303 = scmp.eq.s32.totalorder %s30, 1
      %p304 = por %p302, %p303
      %p306 = scmp.ne.s32.totalorder %s289, %s305
      %p307 = scmp.eq.s32.totalorder %s30, 0
      %p308 = por %p306, %p307
      %p309 = scmp.le.s32.totalorder 1, %s24
      %p310 = scmp.lt.s32.totalorder %s24, 3
      %p311 = pnand %p309, %p310
      %p312 = pneg %p311
      // Predicated region
      $region9: #{tpu_custom_call.1} parent=5 // pred_check
        _
      $region10: #{tpu_custom_call.1} parent=5 // pred_check_branch
        %314 = sbr.rel (%p311) target = $region12
      $region11: #{tpu_custom_call.1} parent=5 // pred_region
        %s315 = ssub.s32 %s24, 1
        // Predicated region
        $region13: #{tpu_custom_call.1} parent=11 // pred_check
          %p316 = pneg %p71
        $region14: #{tpu_custom_call.1} parent=11 // pred_check_branch
          %318 = sbr.rel (%p316) target = $region16
        $region15: #{tpu_custom_call.1} parent=11 // pred_region
          _
        $region16: #{tpu_custom_call.1} parent=11 // pred_fallthru
          _
        // Predicated region
        $region17: #{tpu_custom_call.1} parent=11 // pred_check
          %p319 = pneg %p92
        $region18: #{tpu_custom_call.1} parent=11 // pred_check_branch
          %321 = sbr.rel (%p319) target = $region20
        $region19: #{tpu_custom_call.1} parent=11 // pred_region
          _
        $region20: #{tpu_custom_call.1} parent=11 // pred_fallthru
          _
        // Predicated region
        $region21: #{tpu_custom_call.1} parent=11 // pred_check
          %p322 = pneg %p113
        $region22: #{tpu_custom_call.1} parent=11 // pred_check_branch
          %324 = sbr.rel (%p322) target = $region24
        $region23: #{tpu_custom_call.1} parent=11 // pred_region
          _
        $region24: #{tpu_custom_call.1} parent=11 // pred_fallthru
          _
        // Predicated region
        $region25: #{tpu_custom_call.1} parent=11 // pred_check
          %p325 = pneg %p134
        $region26: #{tpu_custom_call.1} parent=11 // pred_check_branch
          %327 = sbr.rel (%p325) target = $region28
        $region27: #{tpu_custom_call.1} parent=11 // pred_region
          _
        $region28: #{tpu_custom_call.1} parent=11 // pred_fallthru
          _
        // Predicated region
        $region29: #{tpu_custom_call.1} parent=11 // pred_check
          %p328 = pneg %p155
        $region30: #{tpu_custom_call.1} parent=11 // pred_check_branch
          %330 = sbr.rel (%p328) target = $region32
        $region31: #{tpu_custom_call.1} parent=11 // pred_region
          _
        $region32: #{tpu_custom_call.1} parent=11 // pred_fallthru
          _
        // Predicated region
        $region33: #{tpu_custom_call.1} parent=11 // pred_check
          %p331 = pneg %p176
        $region34: #{tpu_custom_call.1} parent=11 // pred_check_branch
          %333 = sbr.rel (%p331) target = $region36
        $region35: #{tpu_custom_call.1} parent=11 // pred_region
          _
        $region36: #{tpu_custom_call.1} parent=11 // pred_fallthru
          _
        // Predicated region
        $region37: #{tpu_custom_call.1} parent=11 // pred_check
          %p334 = pneg %p197
        $region38: #{tpu_custom_call.1} parent=11 // pred_check_branch
          %336 = sbr.rel (%p334) target = $region40
        $region39: #{tpu_custom_call.1} parent=11 // pred_region
          _
        $region40: #{tpu_custom_call.1} parent=11 // pred_fallthru
          _
      $region12: #{tpu_custom_call.1} parent=5 // pred_fallthru
        _
      %p337 = scmp.lt.s32.totalorder %s24, 2
      // Predicated region
      $region41: #{tpu_custom_call.1} parent=5 // pred_check
        %p338 = pneg %p337
      $region42: #{tpu_custom_call.1} parent=5 // pred_check_branch
        %340 = sbr.rel (%p338) target = $region44
      $region43: #{tpu_custom_call.1} parent=5 // pred_region
        // Predicated region
        $region45: #{tpu_custom_call.1} parent=43 // pred_check
          %p341 = pneg %p44
        $region46: #{tpu_custom_call.1} parent=43 // pred_check_branch
          %343 = sbr.rel (%p341) target = $region48
        $region47: #{tpu_custom_call.1} parent=43 // pred_region
          %s344 = smul.u32 16, %s24
          %p345 = scmp.lt.s32.totalorder %s344, 31
          %s346 = scalar_select %p345, %s344, 31
          %s347 = smul.addr %s346, 8
          %s348 = scalar_lea.vmem %s0, %s347
          %s349 = smul.u32 16, %s24
        $region48: #{tpu_custom_call.1} parent=43 // pred_fallthru
          _
      $region44: #{tpu_custom_call.1} parent=5 // pred_fallthru
        _
      %p350 = scmp.le.s32.totalorder 1, %s24
      %p351 = scmp.lt.s32.totalorder %s24, 3
      %p352 = pnand %p350, %p351
      %p353 = pneg %p352
      // Predicated region
      $region49: #{tpu_custom_call.1} parent=5 // pred_check
        _
      $region50: #{tpu_custom_call.1} parent=5 // pred_check_branch
        %355 = sbr.rel (%p352) target = $region52
      $region51: #{tpu_custom_call.1} parent=5 // pred_region
        %s356 = ssub.s32 %s24, 1
        %s357 = smul.u32 16, %s29
        %p358 = scmp.lt.s32.totalorder %s357, 31
        %s359 = scalar_select %p358, %s357, 31
        %s360 = smul.addr %s359, 8
        %s361 = scalar_lea.vmem %s0, %s360
        %p362 = pneg %p50
        %p363 = pneg %p47
        %p364 = pneg %p71
        %p365 = pneg %p68
        %p366 = pneg %p92
        %p367 = pneg %p89
        %p368 = pneg %p113
        %p369 = pneg %p110
        %p370 = pneg %p134
        %p371 = pneg %p131
        %p372 = pneg %p155
        %p373 = pneg %p152
        %p374 = pneg %p176
        %p375 = pneg %p173
        %p376 = pneg %p197
        %p377 = pneg %p194
        %p378 = pneg %p223
        %p379 = pneg %p220
        %s380 = smul.u32 16, %s29
        %p381 = scmp.lt.s32.totalorder %s380, 31
        %s382 = scalar_select %p381, %s380, 31
        %s383 = smul.addr %s382, 8
        %s384 = scalar_lea.vmem %s8, %s383
        %p385 = pneg %p249
        %p386 = pneg %p246
        %s387 = sand.u32 %s236, 1
        %s388 = scalar_lea.sflag [#allocation3], %s387
        %s389 = sand.u32 %s236, 1
        %s390 = smul.addr %s389, 16
        %s391 = scalar_lea.vmem [#allocation2], %s390
        %p392 = pneg %p275
        %p393 = pneg %p272
        %s394 = smul.u32 16, %s29
        %p395 = scmp.lt.s32.totalorder %s394, 31
        %s396 = scalar_select %p395, %s394, 31
        %s397 = smul.addr %s396, 8
        %s398 = scalar_lea.vmem %s10, %s397
        %p399 = pneg %p301
        %p400 = pneg %p298
        %s401 = sand.u32 %s288, 1
        %s402 = scalar_lea.sflag [#allocation5], %s401
        %s403 = sand.u32 %s288, 1
        %s404 = scalar_lea.vmem [#allocation4], %s403
        %s405 = smul.u32 16, %s29
        %p406 = scmp.lt.s32.totalorder %s405, 31
        %s407 = scalar_select %p406, %s405, 31
        %s408 = smul.addr %s407, 8
        %s409 = scalar_lea.vmem %s0, %s408
        %s410 = smul.u32 16, %s29
        %s411 = smul.u32 16, %s29
        %p412 = scmp.lt.s32.totalorder %s411, 31
        %s413 = scalar_select %p412, %s411, 31
        %s414 = smul.addr %s413, 8
        %s415 = scalar_lea.vmem %s8, %s414
        %s416 = smul.u32 16, %s29
        %s417 = smul.u32 16, %s29
        %p418 = scmp.lt.s32.totalorder %s417, 31
        %s419 = scalar_select %p418, %s417, 31
        %s420 = smul.addr %s419, 8
        %s421 = scalar_lea.vmem %s10, %s420
        %s422 = smul.u32 16, %s29
        %v423 = vld [vmem:[%s409] sm:$0xff]
        %v424 = vld [vmem:[%s409 + $0x8] sm:$0xff]
        %v425 = vld [vmem:[%s409 + $0x10] sm:$0xff]
        %v426 = vld [vmem:[%s409 + $0x18] sm:$0xff]
        %v427 = vld [vmem:[%s409 + $0x20] sm:$0xff]
        %v428 = vld [vmem:[%s409 + $0x28] sm:$0xff]
        %v429 = vld [vmem:[%s409 + $0x30] sm:$0xff]
        %v430 = vld [vmem:[%s409 + $0x38] sm:$0xff]
        %v431 = vld [vmem:[%s409 + $0x40] sm:$0xff]
        %v432 = vld [vmem:[%s409 + $0x48] sm:$0xff]
        %v433 = vld [vmem:[%s409 + $0x50] sm:$0xff]
        %v434 = vld [vmem:[%s409 + $0x58] sm:$0xff]
        %v435 = vld [vmem:[%s409 + $0x60] sm:$0xff]
        %v436 = vld [vmem:[%s409 + $0x68] sm:$0xff]
        %v437 = vld [vmem:[%s409 + $0x70] sm:$0xff]
        %v438 = vld [vmem:[%s409 + $0x78] sm:$0xff]
        %v439 = vld [vmem:[%s1] sm:$0xff]
        %v440 = vld [vmem:[%s1 + $0x8] sm:$0xff]
        %v441 = vld [vmem:[%s2] sm:$0x1]
        %v443 = vlaneseq
        %v444 = vshrl.u32 %v443, 7
        %v445 = vsub.s32 0, %v444
        %v446 = vrot.slane %v441, %v445
        %vm448 = vcmask 130048
        %v450 = vsel %vm448, %v423, 0
        %v453 = vsel %vm448, %v424, 0
        %v456 = vsel %vm448, %v425, 0
        %v459 = vsel %vm448, %v426, 0
        %v462 = vsel %vm448, %v427, 0
        %v465 = vsel %vm448, %v428, 0
        %v468 = vsel %vm448, %v429, 0
        %v471 = vsel %vm448, %v430, 0
        %v474 = vsel %vm448, %v431, 0
        %v477 = vsel %vm448, %v432, 0
        %v480 = vsel %vm448, %v433, 0
        %v483 = vsel %vm448, %v434, 0
        %v486 = vsel %vm448, %v435, 0
        %v489 = vsel %vm448, %v436, 0
        %v492 = vsel %vm448, %v437, 0
        %v495 = vsel %vm448, %v438, 0
        %497 = vmatprep.subr.mxu0 0.0
        %498 = vmatpush1.msra.mxu0 %v439
        %499 = vmatprep.subr.mxu0 0.0
        %500 = vmatpush1.msra.mxu0 %v440
        %501 = vmatprep.subr.mxu0 0.0
        %502 = vmatpush1.msra.mxu0 0.0
        %503 = vmatprep.subr.mxu0 0.0
        %504 = vmatpush1.msra.mxu0 0.0
        %505 = vmatprep.subr.mxu0 0.0
        %506 = vmatpush1.msra.mxu0 0.0
        %507 = vmatprep.subr.mxu0 0.0
        %508 = vmatpush1.msra.mxu0 0.0
        %509 = vmatprep.subr.mxu0 0.0
        %510 = vmatpush1.msra.mxu0 0.0
        %511 = vmatprep.subr.mxu0 0.0
        %512 = vmatpush1.msra.mxu0 0.0
        %513 = vmatprep.subr.mxu0 0.0
        %514 = vmatpush1.msra.mxu0 0.0
        %515 = vmatprep.subr.mxu0 0.0
        %516 = vmatpush1.msra.mxu0 0.0
        %517 = vmatprep.subr.mxu0 0.0
        %518 = vmatpush1.msra.mxu0 0.0
        %519 = vmatprep.subr.mxu0 0.0
        %520 = vmatpush1.msra.mxu0 0.0
        %521 = vmatprep.subr.mxu0 0.0
        %522 = vmatpush1.msra.mxu0 0.0
        %523 = vmatprep.subr.mxu0 0.0
        %524 = vmatpush1.msra.mxu0 0.0
        %525 = vmatprep.subr.mxu0 0.0
        %526 = vmatpush1.msra.mxu0 0.0
        %527 = vmatprep.subr.mxu0 0.0
        %528 = vmatpush1.msra.mxu0 0.0
        %529 = vmatprep.subr.mxu0 0.0
        %530 = vmatpush1.msra.mxu0 0.0
        %531 = vmatprep.subr.mxu0 0.0
        %532 = vmatpush1.msra.mxu0 0.0
        %533 = vmatprep.subr.mxu0 0.0
        %534 = vmatpush1.msra.mxu0 0.0
        %535 = vmatprep.subr.mxu0 0.0
        %536 = vmatpush1.msra.mxu0 0.0
        %537 = vmatprep.subr.mxu0 0.0
        %538 = vmatpush1.msra.mxu0 0.0
        %539 = vmatprep.subr.mxu0 0.0
        %540 = vmatpush1.msra.mxu0 0.0
        %541 = vmatprep.subr.mxu0 0.0
        %542 = vmatpush1.msra.mxu0 0.0
        %543 = vmatprep.subr.mxu0 0.0
        %544 = vmatpush1.msra.mxu0 0.0
        %545 = vmatprep.subr.mxu0 0.0
        %546 = vmatpush1.msra.mxu0 0.0
        %547 = vmatprep.subr.mxu0 0.0
        %548 = vmatpush1.msra.mxu0 0.0
        %549 = vmatprep.subr.mxu0 0.0
        %550 = vmatpush1.msra.mxu0 0.0
        %551 = vmatprep.subr.mxu0 0.0
        %552 = vmatpush1.msra.mxu0 0.0
        %553 = vmatprep.subr.mxu0 0.0
        %554 = vmatpush1.msra.mxu0 0.0
        %555 = vmatprep.subr.mxu0 0.0
        %556 = vmatpush1.msra.mxu0 0.0
        %557 = vmatprep.subr.mxu0 0.0
        %558 = vmatpush1.msra.mxu0 0.0
        %559 = vmatprep.subr.mxu0 0.0
        %560 = vmatpush1.msra.mxu0 0.0
        %561 = vmatprep.mubr.f32.mxu0 0.0
        %562 = vmatmul.mubr.f32.gmra.mrb[0].mxu0 %v450
        %v563 = vpop.f32.mrb[0].mxu0
        %v564 = vadd.f32 %v446, %v563
        %v565 = vpop.f32.mrb[0].mxu0
        %566 = vmatprep.mubr.f32.mxu0 0.0
        %567 = vmatmul.mubr.f32.gmra.mrb[0].mxu0 %v453
        %v568 = vpop.f32.mrb[0].mxu0
        %v569 = vadd.f32 %v446, %v568
        %v570 = vpop.f32.mrb[0].mxu0
        %571 = vmatprep.mubr.f32.mxu0 0.0
        %572 = vmatmul.mubr.f32.gmra.mrb[0].mxu0 %v456
        %v573 = vpop.f32.mrb[0].mxu0
        %v574 = vadd.f32 %v446, %v573
        %v575 = vpop.f32.mrb[0].mxu0
        %576 = vmatprep.mubr.f32.mxu0 0.0
        %577 = vmatmul.mubr.f32.gmra.mrb[0].mxu0 %v459
        %v578 = vpop.f32.mrb[0].mxu0
        %v579 = vadd.f32 %v446, %v578
        %v580 = vpop.f32.mrb[0].mxu0
        %581 = vmatprep.mubr.f32.mxu0 0.0
        %582 = vmatmul.mubr.f32.gmra.mrb[0].mxu0 %v462
        %v583 = vpop.f32.mrb[0].mxu0
        %v584 = vadd.f32 %v446, %v583
        %v585 = vpop.f32.mrb[0].mxu0
        %586 = vmatprep.mubr.f32.mxu0 0.0
        %587 = vmatmul.mubr.f32.gmra.mrb[0].mxu0 %v465
        %v588 = vpop.f32.mrb[0].mxu0
        %v589 = vadd.f32 %v446, %v588
        %v590 = vpop.f32.mrb[0].mxu0
        %591 = vmatprep.mubr.f32.mxu0 0.0
        %592 = vmatmul.mubr.f32.gmra.mrb[0].mxu0 %v468
        %v593 = vpop.f32.mrb[0].mxu0
        %v594 = vadd.f32 %v446, %v593
        %v595 = vpop.f32.mrb[0].mxu0
        %596 = vmatprep.mubr.f32.mxu0 0.0
        %597 = vmatmul.mubr.f32.gmra.mrb[0].mxu0 %v471
        %v598 = vpop.f32.mrb[0].mxu0
        %v599 = vadd.f32 %v446, %v598
        %v600 = vpop.f32.mrb[0].mxu0
        %601 = vmatprep.mubr.f32.mxu0 0.0
        %602 = vmatmul.mubr.f32.gmra.mrb[0].mxu0 %v474
        %v603 = vpop.f32.mrb[0].mxu0
        %v604 = vadd.f32 %v446, %v603
        %v605 = vpop.f32.mrb[0].mxu0
        %606 = vmatprep.mubr.f32.mxu0 0.0
        %607 = vmatmul.mubr.f32.gmra.mrb[0].mxu0 %v477
        %v608 = vpop.f32.mrb[0].mxu0
        %v609 = vadd.f32 %v446, %v608
        %v610 = vpop.f32.mrb[0].mxu0
        %611 = vmatprep.mubr.f32.mxu0 0.0
        %612 = vmatmul.mubr.f32.gmra.mrb[0].mxu0 %v480
        %v613 = vpop.f32.mrb[0].mxu0
        %v614 = vadd.f32 %v446, %v613
        %v615 = vpop.f32.mrb[0].mxu0
        %616 = vmatprep.mubr.f32.mxu0 0.0
        %617 = vmatmul.mubr.f32.gmra.mrb[0].mxu0 %v483
        %v618 = vpop.f32.mrb[0].mxu0
        %v619 = vadd.f32 %v446, %v618
        %v620 = vpop.f32.mrb[0].mxu0
        %621 = vmatprep.mubr.f32.mxu0 0.0
        %622 = vmatmul.mubr.f32.gmra.mrb[0].mxu0 %v486
        %v623 = vpop.f32.mrb[0].mxu0
        %v624 = vadd.f32 %v446, %v623
        %v625 = vpop.f32.mrb[0].mxu0
        %626 = vmatprep.mubr.f32.mxu0 0.0
        %627 = vmatmul.mubr.f32.gmra.mrb[0].mxu0 %v489
        %v628 = vpop.f32.mrb[0].mxu0
        %v629 = vadd.f32 %v446, %v628
        %v630 = vpop.f32.mrb[0].mxu0
        %631 = vmatprep.mubr.f32.mxu0 0.0
        %632 = vmatmul.mubr.f32.gmra.mrb[0].mxu0 %v492
        %v633 = vpop.f32.mrb[0].mxu0
        %v634 = vadd.f32 %v446, %v633
        %v635 = vpop.f32.mrb[0].mxu0
        %636 = vmatprep.mubr.f32.mxu0 0.0
        %637 = vmatmul.mubr.f32.gmra.mrb[0].mxu0 %v495
        %v638 = vpop.f32.mrb[0].mxu0
        %v639 = vadd.f32 %v446, %v638
        %v640 = vpop.f32.mrb[0].mxu0
        %641 = vdwg.mxu0
        %v642 = vmax.f32 %v564, 0.0
        %v643 = vmax.f32 %v569, 0.0
        %v644 = vmax.f32 %v574, 0.0
        %v645 = vmax.f32 %v579, 0.0
        %v646 = vmax.f32 %v584, 0.0
        %v647 = vmax.f32 %v589, 0.0
        %v648 = vmax.f32 %v594, 0.0
        %v649 = vmax.f32 %v599, 0.0
        %v650 = vmax.f32 %v604, 0.0
        %v651 = vmax.f32 %v609, 0.0
        %v652 = vmax.f32 %v614, 0.0
        %v653 = vmax.f32 %v619, 0.0
        %v654 = vmax.f32 %v624, 0.0
        %v655 = vmax.f32 %v629, 0.0
        %v656 = vmax.f32 %v634, 0.0
        %v657 = vmax.f32 %v639, 0.0
        %v658 = vld [vmem:[%s3] sm:$0xff]
        %v659 = vld [vmem:[%s3 + $0x8] sm:$0xff]
        %v660 = vld [vmem:[%s3 + $0x10] sm:$0xff]
        %v661 = vld [vmem:[%s3 + $0x18] sm:$0xff]
        %v662 = vld [vmem:[%s4] sm:$0x1]
        %v664 = vlaneseq
        %v665 = vshrl.u32 %v664, 7
        %v666 = vsub.s32 0, %v665
        %v667 = vrot.slane %v662, %v666
        %vm669 = vcmask 261120
        %v671 = vsel %vm669, %v642, 0
        %v674 = vsel %vm669, %v643, 0
        %v677 = vsel %vm669, %v644, 0
        %v680 = vsel %vm669, %v645, 0
        %v683 = vsel %vm669, %v646, 0
        %v686 = vsel %vm669, %v647, 0
        %v689 = vsel %vm669, %v648, 0
        %v692 = vsel %vm669, %v649, 0
        %v695 = vsel %vm669, %v650, 0
        %v698 = vsel %vm669, %v651, 0
        %v701 = vsel %vm669, %v652, 0
        %v704 = vsel %vm669, %v653, 0
        %v707 = vsel %vm669, %v654, 0
        %v710 = vsel %vm669, %v655, 0
        %v713 = vsel %vm669, %v656, 0
        %v716 = vsel %vm669, %v657, 0
        %718 = vmatprep.subr.mxu0 0.0
        %719 = vmatpush1.msra.mxu0 %v658
        %720 = vmatprep.subr.mxu0 0.0
        %721 = vmatpush1.msra.mxu0 %v659
        %722 = vmatprep.subr.mxu0 0.0
        %723 = vmatpush1.msra.mxu0 %v660
        %724 = vmatprep.subr.mxu0 0.0
        %725 = vmatpush1.msra.mxu0 %v661
        %726 = vmatprep.subr.mxu0 0.0
        %727 = vmatpush1.msra.mxu0 0.0
        %728 = vmatprep.subr.mxu0 0.0
        %729 = vmatpush1.msra.mxu0 0.0
        %730 = vmatprep.subr.mxu0 0.0
        %731 = vmatpush1.msra.mxu0 0.0
        %732 = vmatprep.subr.mxu0 0.0
        %733 = vmatpush1.msra.mxu0 0.0
        %734 = vmatprep.subr.mxu0 0.0
        %735 = vmatpush1.msra.mxu0 0.0
        %736 = vmatprep.subr.mxu0 0.0
        %737 = vmatpush1.msra.mxu0 0.0
        %738 = vmatprep.subr.mxu0 0.0
        %739 = vmatpush1.msra.mxu0 0.0
        %740 = vmatprep.subr.mxu0 0.0
        %741 = vmatpush1.msra.mxu0 0.0
        %742 = vmatprep.subr.mxu0 0.0
        %743 = vmatpush1.msra.mxu0 0.0
        %744 = vmatprep.subr.mxu0 0.0
        %745 = vmatpush1.msra.mxu0 0.0
        %746 = vmatprep.subr.mxu0 0.0
        %747 = vmatpush1.msra.mxu0 0.0
        %748 = vmatprep.subr.mxu0 0.0
        %749 = vmatpush1.msra.mxu0 0.0
        %750 = vmatprep.subr.mxu0 0.0
        %751 = vmatpush1.msra.mxu0 0.0
        %752 = vmatprep.subr.mxu0 0.0
        %753 = vmatpush1.msra.mxu0 0.0
        %754 = vmatprep.subr.mxu0 0.0
        %755 = vmatpush1.msra.mxu0 0.0
        %756 = vmatprep.subr.mxu0 0.0
        %757 = vmatpush1.msra.mxu0 0.0
        %758 = vmatprep.subr.mxu0 0.0
        %759 = vmatpush1.msra.mxu0 0.0
        %760 = vmatprep.subr.mxu0 0.0
        %761 = vmatpush1.msra.mxu0 0.0
        %762 = vmatprep.subr.mxu0 0.0
        %763 = vmatpush1.msra.mxu0 0.0
        %764 = vmatprep.subr.mxu0 0.0
        %765 = vmatpush1.msra.mxu0 0.0
        %766 = vmatprep.subr.mxu0 0.0
        %767 = vmatpush1.msra.mxu0 0.0
        %768 = vmatprep.subr.mxu0 0.0
        %769 = vmatpush1.msra.mxu0 0.0
        %770 = vmatprep.subr.mxu0 0.0
        %771 = vmatpush1.msra.mxu0 0.0
        %772 = vmatprep.subr.mxu0 0.0
        %773 = vmatpush1.msra.mxu0 0.0
        %774 = vmatprep.subr.mxu0 0.0
        %775 = vmatpush1.msra.mxu0 0.0
        %776 = vmatprep.subr.mxu0 0.0
        %777 = vmatpush1.msra.mxu0 0.0
        %778 = vmatprep.subr.mxu0 0.0
        %779 = vmatpush1.msra.mxu0 0.0
        %780 = vmatprep.subr.mxu0 0.0
        %781 = vmatpush1.msra.mxu0 0.0
        %782 = vmatprep.mubr.f32.mxu0 0.0
        %783 = vmatmul.mubr.f32.gmra.mrb[0].mxu0 %v671
        %v784 = vpop.f32.mrb[0].mxu0
        %v785 = vadd.f32 %v667, %v784
        %v786 = vpop.f32.mrb[0].mxu0
        %787 = vmatprep.mubr.f32.mxu0 0.0
        %788 = vmatmul.mubr.f32.gmra.mrb[0].mxu0 %v674
        %v789 = vpop.f32.mrb[0].mxu0
        %v790 = vadd.f32 %v667, %v789
        %v791 = vpop.f32.mrb[0].mxu0
        %792 = vmatprep.mubr.f32.mxu0 0.0
        %793 = vmatmul.mubr.f32.gmra.mrb[0].mxu0 %v677
        %v794 = vpop.f32.mrb[0].mxu0
        %v795 = vadd.f32 %v667, %v794
        %v796 = vpop.f32.mrb[0].mxu0
        %797 = vmatprep.mubr.f32.mxu0 0.0
        %798 = vmatmul.mubr.f32.gmra.mrb[0].mxu0 %v680
        %v799 = vpop.f32.mrb[0].mxu0
        %v800 = vadd.f32 %v667, %v799
        %v801 = vpop.f32.mrb[0].mxu0
        %802 = vmatprep.mubr.f32.mxu0 0.0
        %803 = vmatmul.mubr.f32.gmra.mrb[0].mxu0 %v683
        %v804 = vpop.f32.mrb[0].mxu0
        %v805 = vadd.f32 %v667, %v804
        %v806 = vpop.f32.mrb[0].mxu0
        %807 = vmatprep.mubr.f32.mxu0 0.0
        %808 = vmatmul.mubr.f32.gmra.mrb[0].mxu0 %v686
        %v809 = vpop.f32.mrb[0].mxu0
        %v810 = vadd.f32 %v667, %v809
        %v811 = vpop.f32.mrb[0].mxu0
        %812 = vmatprep.mubr.f32.mxu0 0.0
        %813 = vmatmul.mubr.f32.gmra.mrb[0].mxu0 %v689
        %v814 = vpop.f32.mrb[0].mxu0
        %v815 = vadd.f32 %v667, %v814
        %v816 = vpop.f32.mrb[0].mxu0
        %817 = vmatprep.mubr.f32.mxu0 0.0
        %818 = vmatmul.mubr.f32.gmra.mrb[0].mxu0 %v692
        %v819 = vpop.f32.mrb[0].mxu0
        %v820 = vadd.f32 %v667, %v819
        %v821 = vpop.f32.mrb[0].mxu0
        %822 = vmatprep.mubr.f32.mxu0 0.0
        %823 = vmatmul.mubr.f32.gmra.mrb[0].mxu0 %v695
        %v824 = vpop.f32.mrb[0].mxu0
        %v825 = vadd.f32 %v667, %v824
        %v826 = vpop.f32.mrb[0].mxu0
        %827 = vmatprep.mubr.f32.mxu0 0.0
        %828 = vmatmul.mubr.f32.gmra.mrb[0].mxu0 %v698
        %v829 = vpop.f32.mrb[0].mxu0
        %v830 = vadd.f32 %v667, %v829
        %v831 = vpop.f32.mrb[0].mxu0
        %832 = vmatprep.mubr.f32.mxu0 0.0
        %833 = vmatmul.mubr.f32.gmra.mrb[0].mxu0 %v701
        %v834 = vpop.f32.mrb[0].mxu0
        %v835 = vadd.f32 %v667, %v834
        %v836 = vpop.f32.mrb[0].mxu0
        %837 = vmatprep.mubr.f32.mxu0 0.0
        %838 = vmatmul.mubr.f32.gmra.mrb[0].mxu0 %v704
        %v839 = vpop.f32.mrb[0].mxu0
        %v840 = vadd.f32 %v667, %v839
        %v841 = vpop.f32.mrb[0].mxu0
        %842 = vmatprep.mubr.f32.mxu0 0.0
        %843 = vmatmul.mubr.f32.gmra.mrb[0].mxu0 %v707
        %v844 = vpop.f32.mrb[0].mxu0
        %v845 = vadd.f32 %v667, %v844
        %v846 = vpop.f32.mrb[0].mxu0
        %847 = vmatprep.mubr.f32.mxu0 0.0
        %848 = vmatmul.mubr.f32.gmra.mrb[0].mxu0 %v710
        %v849 = vpop.f32.mrb[0].mxu0
        %v850 = vadd.f32 %v667, %v849
        %v851 = vpop.f32.mrb[0].mxu0
        %852 = vmatprep.mubr.f32.mxu0 0.0
        %853 = vmatmul.mubr.f32.gmra.mrb[0].mxu0 %v713
        %v854 = vpop.f32.mrb[0].mxu0
        %v855 = vadd.f32 %v667, %v854
        %v856 = vpop.f32.mrb[0].mxu0
        %857 = vmatprep.mubr.f32.mxu0 0.0
        %858 = vmatmul.mubr.f32.gmra.mrb[0].mxu0 %v716
        %v859 = vpop.f32.mrb[0].mxu0
        %v860 = vadd.f32 %v667, %v859
        %v861 = vpop.f32.mrb[0].mxu0
        %862 = vdwg.mxu0
        %v863 = vmax.f32 %v785, 0.0
        %v864 = vmax.f32 %v790, 0.0
        %v865 = vmax.f32 %v795, 0.0
        %v866 = vmax.f32 %v800, 0.0
        %v867 = vmax.f32 %v805, 0.0
        %v868 = vmax.f32 %v810, 0.0
        %v869 = vmax.f32 %v815, 0.0
        %v870 = vmax.f32 %v820, 0.0
        %v871 = vmax.f32 %v825, 0.0
        %v872 = vmax.f32 %v830, 0.0
        %v873 = vmax.f32 %v835, 0.0
        %v874 = vmax.f32 %v840, 0.0
        %v875 = vmax.f32 %v845, 0.0
        %v876 = vmax.f32 %v850, 0.0
        %v877 = vmax.f32 %v855, 0.0
        %v878 = vmax.f32 %v860, 0.0
        %v879 = vld [vmem:[%s5] sm:$0xff]
        %v880 = vld [vmem:[%s5 + $0x8] sm:$0xff]
        %v881 = vld [vmem:[%s5 + $0x10] sm:$0xff]
        %v882 = vld [vmem:[%s5 + $0x18] sm:$0xff]
        %v883 = vld [vmem:[%s6] sm:$0x1]
        %v885 = vlaneseq
        %v886 = vshrl.u32 %v885, 7
        %v887 = vsub.s32 0, %v886
        %v888 = vrot.slane %v883, %v887
        %v891 = vsel %vm669, %v863, 0
        %v894 = vsel %vm669, %v864, 0
        %v897 = vsel %vm669, %v865, 0
        %v900 = vsel %vm669, %v866, 0
        %v903 = vsel %vm669, %v867, 0
        %v906 = vsel %vm669, %v868, 0
        %v909 = vsel %vm669, %v869, 0
        %v912 = vsel %vm669, %v870, 0
        %v915 = vsel %vm669, %v871, 0
        %v918 = vsel %vm669, %v872, 0
        %v921 = vsel %vm669, %v873, 0
        %v924 = vsel %vm669, %v874, 0
        %v927 = vsel %vm669, %v875, 0
        %v930 = vsel %vm669, %v876, 0
        %v933 = vsel %vm669, %v877, 0
        %v936 = vsel %vm669, %v878, 0
        %938 = vmatprep.subr.mxu0 0.0
        %939 = vmatpush1.msra.mxu0 %v879
        %940 = vmatprep.subr.mxu0 0.0
        %941 = vmatpush1.msra.mxu0 %v880
        %942 = vmatprep.subr.mxu0 0.0
        %943 = vmatpush1.msra.mxu0 %v881
        %944 = vmatprep.subr.mxu0 0.0
        %945 = vmatpush1.msra.mxu0 %v882
        %946 = vmatprep.subr.mxu0 0.0
        %947 = vmatpush1.msra.mxu0 0.0
        %948 = vmatprep.subr.mxu0 0.0
        %949 = vmatpush1.msra.mxu0 0.0
        %950 = vmatprep.subr.mxu0 0.0
        %951 = vmatpush1.msra.mxu0 0.0
        %952 = vmatprep.subr.mxu0 0.0
        %953 = vmatpush1.msra.mxu0 0.0
        %954 = vmatprep.subr.mxu0 0.0
        %955 = vmatpush1.msra.mxu0 0.0
        %956 = vmatprep.subr.mxu0 0.0
        %957 = vmatpush1.msra.mxu0 0.0
        %958 = vmatprep.subr.mxu0 0.0
        %959 = vmatpush1.msra.mxu0 0.0
        %960 = vmatprep.subr.mxu0 0.0
        %961 = vmatpush1.msra.mxu0 0.0
        %962 = vmatprep.subr.mxu0 0.0
        %963 = vmatpush1.msra.mxu0 0.0
        %964 = vmatprep.subr.mxu0 0.0
        %965 = vmatpush1.msra.mxu0 0.0
        %966 = vmatprep.subr.mxu0 0.0
        %967 = vmatpush1.msra.mxu0 0.0
        %968 = vmatprep.subr.mxu0 0.0
        %969 = vmatpush1.msra.mxu0 0.0
        %970 = vmatprep.subr.mxu0 0.0
        %971 = vmatpush1.msra.mxu0 0.0
        %972 = vmatprep.subr.mxu0 0.0
        %973 = vmatpush1.msra.mxu0 0.0
        %974 = vmatprep.subr.mxu0 0.0
        %975 = vmatpush1.msra.mxu0 0.0
        %976 = vmatprep.subr.mxu0 0.0
        %977 = vmatpush1.msra.mxu0 0.0
        %978 = vmatprep.subr.mxu0 0.0
        %979 = vmatpush1.msra.mxu0 0.0
        %980 = vmatprep.subr.mxu0 0.0
        %981 = vmatpush1.msra.mxu0 0.0
        %982 = vmatprep.subr.mxu0 0.0
        %983 = vmatpush1.msra.mxu0 0.0
        %984 = vmatprep.subr.mxu0 0.0
        %985 = vmatpush1.msra.mxu0 0.0
        %986 = vmatprep.subr.mxu0 0.0
        %987 = vmatpush1.msra.mxu0 0.0
        %988 = vmatprep.subr.mxu0 0.0
        %989 = vmatpush1.msra.mxu0 0.0
        %990 = vmatprep.subr.mxu0 0.0
        %991 = vmatpush1.msra.mxu0 0.0
        %992 = vmatprep.subr.mxu0 0.0
        %993 = vmatpush1.msra.mxu0 0.0
        %994 = vmatprep.subr.mxu0 0.0
        %995 = vmatpush1.msra.mxu0 0.0
        %996 = vmatprep.subr.mxu0 0.0
        %997 = vmatpush1.msra.mxu0 0.0
        %998 = vmatprep.subr.mxu0 0.0
        %999 = vmatpush1.msra.mxu0 0.0
        %1000 = vmatprep.subr.mxu0 0.0
        %1001 = vmatpush1.msra.mxu0 0.0
        %1002 = vmatprep.mubr.f32.mxu0 0.0
        %1003 = vmatmul.mubr.f32.gmra.mrb[0].mxu0 %v891
        %v1004 = vpop.f32.mrb[0].mxu0
        %v1005 = vadd.f32 %v888, %v1004
        %v1006 = vpop.f32.mrb[0].mxu0
        %1007 = vmatprep.mubr.f32.mxu0 0.0
        %1008 = vmatmul.mubr.f32.gmra.mrb[0].mxu0 %v894
        %v1009 = vpop.f32.mrb[0].mxu0
        %v1010 = vadd.f32 %v888, %v1009
        %v1011 = vpop.f32.mrb[0].mxu0
        %1012 = vmatprep.mubr.f32.mxu0 0.0
        %1013 = vmatmul.mubr.f32.gmra.mrb[0].mxu0 %v897
        %v1014 = vpop.f32.mrb[0].mxu0
        %v1015 = vadd.f32 %v888, %v1014
        %v1016 = vpop.f32.mrb[0].mxu0
        %1017 = vmatprep.mubr.f32.mxu0 0.0
        %1018 = vmatmul.mubr.f32.gmra.mrb[0].mxu0 %v900
        %v1019 = vpop.f32.mrb[0].mxu0
        %v1020 = vadd.f32 %v888, %v1019
        %v1021 = vpop.f32.mrb[0].mxu0
        %1022 = vmatprep.mubr.f32.mxu0 0.0
        %1023 = vmatmul.mubr.f32.gmra.mrb[0].mxu0 %v903
        %v1024 = vpop.f32.mrb[0].mxu0
        %v1025 = vadd.f32 %v888, %v1024
        %v1026 = vpop.f32.mrb[0].mxu0
        %1027 = vmatprep.mubr.f32.mxu0 0.0
        %1028 = vmatmul.mubr.f32.gmra.mrb[0].mxu0 %v906
        %v1029 = vpop.f32.mrb[0].mxu0
        %v1030 = vadd.f32 %v888, %v1029
        %v1031 = vpop.f32.mrb[0].mxu0
        %1032 = vmatprep.mubr.f32.mxu0 0.0
        %1033 = vmatmul.mubr.f32.gmra.mrb[0].mxu0 %v909
        %v1034 = vpop.f32.mrb[0].mxu0
        %v1035 = vadd.f32 %v888, %v1034
        %v1036 = vpop.f32.mrb[0].mxu0
        %1037 = vmatprep.mubr.f32.mxu0 0.0
        %1038 = vmatmul.mubr.f32.gmra.mrb[0].mxu0 %v912
        %v1039 = vpop.f32.mrb[0].mxu0
        %v1040 = vadd.f32 %v888, %v1039
        %v1041 = vpop.f32.mrb[0].mxu0
        %1042 = vmatprep.mubr.f32.mxu0 0.0
        %1043 = vmatmul.mubr.f32.gmra.mrb[0].mxu0 %v915
        %v1044 = vpop.f32.mrb[0].mxu0
        %v1045 = vadd.f32 %v888, %v1044
        %v1046 = vpop.f32.mrb[0].mxu0
        %1047 = vmatprep.mubr.f32.mxu0 0.0
        %1048 = vmatmul.mubr.f32.gmra.mrb[0].mxu0 %v918
        %v1049 = vpop.f32.mrb[0].mxu0
        %v1050 = vadd.f32 %v888, %v1049
        %v1051 = vpop.f32.mrb[0].mxu0
        %1052 = vmatprep.mubr.f32.mxu0 0.0
        %1053 = vmatmul.mubr.f32.gmra.mrb[0].mxu0 %v921
        %v1054 = vpop.f32.mrb[0].mxu0
        %v1055 = vadd.f32 %v888, %v1054
        %v1056 = vpop.f32.mrb[0].mxu0
        %1057 = vmatprep.mubr.f32.mxu0 0.0
        %1058 = vmatmul.mubr.f32.gmra.mrb[0].mxu0 %v924
        %v1059 = vpop.f32.mrb[0].mxu0
        %v1060 = vadd.f32 %v888, %v1059
        %v1061 = vpop.f32.mrb[0].mxu0
        %1062 = vmatprep.mubr.f32.mxu0 0.0
        %1063 = vmatmul.mubr.f32.gmra.mrb[0].mxu0 %v927
        %v1064 = vpop.f32.mrb[0].mxu0
        %v1065 = vadd.f32 %v888, %v1064
        %v1066 = vpop.f32.mrb[0].mxu0
        %1067 = vmatprep.mubr.f32.mxu0 0.0
        %1068 = vmatmul.mubr.f32.gmra.mrb[0].mxu0 %v930
        %v1069 = vpop.f32.mrb[0].mxu0
        %v1070 = vadd.f32 %v888, %v1069
        %v1071 = vpop.f32.mrb[0].mxu0
        %1072 = vmatprep.mubr.f32.mxu0 0.0
        %1073 = vmatmul.mubr.f32.gmra.mrb[0].mxu0 %v933
        %v1074 = vpop.f32.mrb[0].mxu0
        %v1075 = vadd.f32 %v888, %v1074
        %v1076 = vpop.f32.mrb[0].mxu0
        %1077 = vmatprep.mubr.f32.mxu0 0.0
        %1078 = vmatmul.mubr.f32.gmra.mrb[0].mxu0 %v936
        %v1079 = vpop.f32.mrb[0].mxu0
        %v1080 = vadd.f32 %v888, %v1079
        %v1081 = vpop.f32.mrb[0].mxu0
        %1082 = vdwg.mxu0
        %1083 = vst.msk [vmem:[%s415] sm:$0xff] %vm669, %v1005
        %1084 = vst.msk [vmem:[%s415 + $0x8] sm:$0xff] %vm669, %v1010
        %1085 = vst.msk [vmem:[%s415 + $0x10] sm:$0xff] %vm669, %v1015
        %1086 = vst.msk [vmem:[%s415 + $0x18] sm:$0xff] %vm669, %v1020
        %1087 = vst.msk [vmem:[%s415 + $0x20] sm:$0xff] %vm669, %v1025
        %1088 = vst.msk [vmem:[%s415 + $0x28] sm:$0xff] %vm669, %v1030
        %1089 = vst.msk [vmem:[%s415 + $0x30] sm:$0xff] %vm669, %v1035
        %1090 = vst.msk [vmem:[%s415 + $0x38] sm:$0xff] %vm669, %v1040
        %1091 = vst.msk [vmem:[%s415 + $0x40] sm:$0xff] %vm669, %v1045
        %1092 = vst.msk [vmem:[%s415 + $0x48] sm:$0xff] %vm669, %v1050
        %1093 = vst.msk [vmem:[%s415 + $0x50] sm:$0xff] %vm669, %v1055
        %1094 = vst.msk [vmem:[%s415 + $0x58] sm:$0xff] %vm669, %v1060
        %1095 = vst.msk [vmem:[%s415 + $0x60] sm:$0xff] %vm669, %v1065
        %1096 = vst.msk [vmem:[%s415 + $0x68] sm:$0xff] %vm669, %v1070
        %1097 = vst.msk [vmem:[%s415 + $0x70] sm:$0xff] %vm669, %v1075
        %1098 = vst.msk [vmem:[%s415 + $0x78] sm:$0xff] %vm669, %v1080
        %v1099 = vmul.f32 %v1005, %v1005
        %v1100 = vmul.f32 %v1010, %v1010
        %v1101 = vmul.f32 %v1015, %v1015
        %v1102 = vmul.f32 %v1020, %v1020
        %v1103 = vmul.f32 %v1025, %v1025
        %v1104 = vmul.f32 %v1030, %v1030
        %v1105 = vmul.f32 %v1035, %v1035
        %v1106 = vmul.f32 %v1040, %v1040
        %v1107 = vmul.f32 %v1045, %v1045
        %v1108 = vmul.f32 %v1050, %v1050
        %v1109 = vmul.f32 %v1055, %v1055
        %v1110 = vmul.f32 %v1060, %v1060
        %v1111 = vmul.f32 %v1065, %v1065
        %v1112 = vmul.f32 %v1070, %v1070
        %v1113 = vmul.f32 %v1075, %v1075
        %v1114 = vmul.f32 %v1080, %v1080
        %v1115 = vsel %vm669, %v1099, 0.0
        %1116 = vadd.xlane.f32.xlu0 %v1115
        %v1117 = vpop.xlane.xlu0 %1116
        %v1118 = vsel %vm669, %v1100, 0.0
        %1119 = vadd.xlane.f32.xlu0 %v1118
        %v1120 = vpop.xlane.xlu0 %1119
        %v1121 = vsel %vm669, %v1101, 0.0
        %1122 = vadd.xlane.f32.xlu0 %v1121
        %v1123 = vpop.xlane.xlu0 %1122
        %v1124 = vsel %vm669, %v1102, 0.0
        %1125 = vadd.xlane.f32.xlu0 %v1124
        %v1126 = vpop.xlane.xlu0 %1125
        %v1127 = vsel %vm669, %v1103, 0.0
        %1128 = vadd.xlane.f32.xlu0 %v1127
        %v1129 = vpop.xlane.xlu0 %1128
        %v1130 = vsel %vm669, %v1104, 0.0
        %1131 = vadd.xlane.f32.xlu0 %v1130
        %v1132 = vpop.xlane.xlu0 %1131
        %v1133 = vsel %vm669, %v1105, 0.0
        %1134 = vadd.xlane.f32.xlu0 %v1133
        %v1135 = vpop.xlane.xlu0 %1134
        %v1136 = vsel %vm669, %v1106, 0.0
        %1137 = vadd.xlane.f32.xlu0 %v1136
        %v1138 = vpop.xlane.xlu0 %1137
        %v1139 = vsel %vm669, %v1107, 0.0
        %1140 = vadd.xlane.f32.xlu0 %v1139
        %v1141 = vpop.xlane.xlu0 %1140
        %v1142 = vsel %vm669, %v1108, 0.0
        %1143 = vadd.xlane.f32.xlu0 %v1142
        %v1144 = vpop.xlane.xlu0 %1143
        %v1145 = vsel %vm669, %v1109, 0.0
        %1146 = vadd.xlane.f32.xlu0 %v1145
        %v1147 = vpop.xlane.xlu0 %1146
        %v1148 = vsel %vm669, %v1110, 0.0
        %1149 = vadd.xlane.f32.xlu0 %v1148
        %v1150 = vpop.xlane.xlu0 %1149
        %v1151 = vsel %vm669, %v1111, 0.0
        %1152 = vadd.xlane.f32.xlu0 %v1151
        %v1153 = vpop.xlane.xlu0 %1152
        %v1154 = vsel %vm669, %v1112, 0.0
        %1155 = vadd.xlane.f32.xlu0 %v1154
        %v1156 = vpop.xlane.xlu0 %1155
        %v1157 = vsel %vm669, %v1113, 0.0
        %1158 = vadd.xlane.f32.xlu0 %v1157
        %v1159 = vpop.xlane.xlu0 %1158
        %v1160 = vsel %vm669, %v1114, 0.0
        %1161 = vadd.xlane.f32.xlu0 %v1160
        %v1162 = vpop.xlane.xlu0 %1161
        %vm1163 = vcmask 7168
        %1164 = vst.msk [vmem:[%s421] sm:$0xff] %vm1163, %v1117
        %1165 = vst.msk [vmem:[%s421 + $0x8] sm:$0xff] %vm1163, %v1120
        %1166 = vst.msk [vmem:[%s421 + $0x10] sm:$0xff] %vm1163, %v1123
        %1167 = vst.msk [vmem:[%s421 + $0x18] sm:$0xff] %vm1163, %v1126
        %1168 = vst.msk [vmem:[%s421 + $0x20] sm:$0xff] %vm1163, %v1129
        %1169 = vst.msk [vmem:[%s421 + $0x28] sm:$0xff] %vm1163, %v1132
        %1170 = vst.msk [vmem:[%s421 + $0x30] sm:$0xff] %vm1163, %v1135
        %1171 = vst.msk [vmem:[%s421 + $0x38] sm:$0xff] %vm1163, %v1138
        %1172 = vst.msk [vmem:[%s421 + $0x40] sm:$0xff] %vm1163, %v1141
        %1173 = vst.msk [vmem:[%s421 + $0x48] sm:$0xff] %vm1163, %v1144
        %1174 = vst.msk [vmem:[%s421 + $0x50] sm:$0xff] %vm1163, %v1147
        %1175 = vst.msk [vmem:[%s421 + $0x58] sm:$0xff] %vm1163, %v1150
        %1176 = vst.msk [vmem:[%s421 + $0x60] sm:$0xff] %vm1163, %v1153
        %1177 = vst.msk [vmem:[%s421 + $0x68] sm:$0xff] %vm1163, %v1156
        %1178 = vst.msk [vmem:[%s421 + $0x70] sm:$0xff] %vm1163, %v1159
        %1179 = vst.msk [vmem:[%s421 + $0x78] sm:$0xff] %vm1163, %v1162
        %v1181 = vsel %vm669, 1.0, 0
        %v1184 = vsel %vm669, %v1099, 0
        %v1187 = vsel %vm669, %v1100, 0
        %v1190 = vsel %vm669, %v1101, 0
        %v1193 = vsel %vm669, %v1102, 0
        %v1196 = vsel %vm669, %v1103, 0
        %v1199 = vsel %vm669, %v1104, 0
        %v1202 = vsel %vm669, %v1105, 0
        %v1205 = vsel %vm669, %v1106, 0
        %v1208 = vsel %vm669, %v1107, 0
        %v1211 = vsel %vm669, %v1108, 0
        %v1214 = vsel %vm669, %v1109, 0
        %v1217 = vsel %vm669, %v1110, 0
        %v1220 = vsel %vm669, %v1111, 0
        %v1223 = vsel %vm669, %v1112, 0
        %v1226 = vsel %vm669, %v1113, 0
        %v1229 = vsel %vm669, %v1114, 0
        %1231 = vmatprep.subr.mxu0 0.0
        %1232 = vmatpush1.xpose.msra.mxu0 %v1184
        %1233 = vmatprep.subr.mxu0 0.0
        %1234 = vmatpush1.xpose.msra.mxu0 %v1187
        %1235 = vmatprep.subr.mxu0 0.0
        %1236 = vmatpush1.xpose.msra.mxu0 %v1190
        %1237 = vmatprep.subr.mxu0 0.0
        %1238 = vmatpush1.xpose.msra.mxu0 %v1193
        %1239 = vmatprep.subr.mxu0 0.0
        %1240 = vmatpush1.xpose.msra.mxu0 %v1196
        %1241 = vmatprep.subr.mxu0 0.0
        %1242 = vmatpush1.xpose.msra.mxu0 %v1199
        %1243 = vmatprep.subr.mxu0 0.0
        %1244 = vmatpush1.xpose.msra.mxu0 %v1202
        %1245 = vmatprep.subr.mxu0 0.0
        %1246 = vmatpush1.xpose.msra.mxu0 %v1205
        %1247 = vmatprep.subr.mxu0 0.0
        %1248 = vmatpush1.xpose.msra.mxu0 %v1208
        %1249 = vmatprep.subr.mxu0 0.0
        %1250 = vmatpush1.xpose.msra.mxu0 %v1211
        %1251 = vmatprep.subr.mxu0 0.0
        %1252 = vmatpush1.xpose.msra.mxu0 %v1214
        %1253 = vmatprep.subr.mxu0 0.0
        %1254 = vmatpush1.xpose.msra.mxu0 %v1217
        %1255 = vmatprep.subr.mxu0 0.0
        %1256 = vmatpush1.xpose.msra.mxu0 %v1220
        %1257 = vmatprep.subr.mxu0 0.0
        %1258 = vmatpush1.xpose.msra.mxu0 %v1223
        %1259 = vmatprep.subr.mxu0 0.0
        %1260 = vmatpush1.xpose.msra.mxu0 %v1226
        %1261 = vmatprep.subr.mxu0 0.0
        %1262 = vmatpush1.xpose.msra.mxu0 %v1229
        %1263 = vmatprep.subr.mxu0 0.0
        %1264 = vmatpush1.xpose.msra.mxu0 0.0
        %1265 = vmatprep.subr.mxu0 0.0
        %1266 = vmatpush1.xpose.msra.mxu0 0.0
        %1267 = vmatprep.subr.mxu0 0.0
        %1268 = vmatpush1.xpose.msra.mxu0 0.0
        %1269 = vmatprep.subr.mxu0 0.0
        %1270 = vmatpush1.xpose.msra.mxu0 0.0
        %1271 = vmatprep.subr.mxu0 0.0
        %1272 = vmatpush1.xpose.msra.mxu0 0.0
        %1273 = vmatprep.subr.mxu0 0.0
        %1274 = vmatpush1.xpose.msra.mxu0 0.0
        %1275 = vmatprep.subr.mxu0 0.0
        %1276 = vmatpush1.xpose.msra.mxu0 0.0
        %1277 = vmatprep.subr.mxu0 0.0
        %1278 = vmatpush1.xpose.msra.mxu0 0.0
        %1279 = vmatprep.subr.mxu0 0.0
        %1280 = vmatpush1.xpose.msra.mxu0 0.0
        %1281 = vmatprep.subr.mxu0 0.0
        %1282 = vmatpush1.xpose.msra.mxu0 0.0
        %1283 = vmatprep.subr.mxu0 0.0
        %1284 = vmatpush1.xpose.msra.mxu0 0.0
        %1285 = vmatprep.subr.mxu0 0.0
        %1286 = vmatpush1.xpose.msra.mxu0 0.0
        %1287 = vmatprep.subr.mxu0 0.0
        %1288 = vmatpush1.xpose.msra.mxu0 0.0
        %1289 = vmatprep.subr.mxu0 0.0
        %1290 = vmatpush1.xpose.msra.mxu0 0.0
        %1291 = vmatprep.subr.mxu0 0.0
        %1292 = vmatpush1.xpose.msra.mxu0 0.0
        %1293 = vmatprep.subr.mxu0 0.0
        %1294 = vmatpush1.xpose.msra.mxu0 0.0
        %1295 = vmatprep.mubr.f32.mxu0 0.0
        %1296 = vmatmul.mubr.f32.gmra.mrb[0].mxu0 %v1181
        %v1297 = vpop.f32.mrb[0].mxu0
        %v1298 = vadd.f32 0.0, %v1297
        %v1299 = vpop.f32.mrb[0].mxu0
        %1300 = vdwg.mxu0
        %1301 = vst [vmem:[%s404] sm:$0x1] %v1298
        %v1302 = vld [vmem:[%s7] sm:$0xff]
        %v1303 = vld [vmem:[%s7 + $0x8] sm:$0xff]
        %v1305 = vsel %vm669, %v1302, 0
        %v1308 = vsel %vm669, %v1303, 0
        %v1311 = vsel %vm669, %v1005, 0
        %v1314 = vsel %vm669, %v1010, 0
        %v1317 = vsel %vm669, %v1015, 0
        %v1320 = vsel %vm669, %v1020, 0
        %v1323 = vsel %vm669, %v1025, 0
        %v1326 = vsel %vm669, %v1030, 0
        %v1329 = vsel %vm669, %v1035, 0
        %v1332 = vsel %vm669, %v1040, 0
        %v1335 = vsel %vm669, %v1045, 0
        %v1338 = vsel %vm669, %v1050, 0
        %v1341 = vsel %vm669, %v1055, 0
        %v1344 = vsel %vm669, %v1060, 0
        %v1347 = vsel %vm669, %v1065, 0
        %v1350 = vsel %vm669, %v1070, 0
        %v1353 = vsel %vm669, %v1075, 0
        %v1356 = vsel %vm669, %v1080, 0
        %1358 = vmatprep.subr.mxu0 0.0
        %1359 = vmatpush1.xpose.msra.mxu0 %v1311
        %1360 = vmatprep.subr.mxu0 0.0
        %1361 = vmatpush1.xpose.msra.mxu0 %v1314
        %1362 = vmatprep.subr.mxu0 0.0
        %1363 = vmatpush1.xpose.msra.mxu0 %v1317
        %1364 = vmatprep.subr.mxu0 0.0
        %1365 = vmatpush1.xpose.msra.mxu0 %v1320
        %1366 = vmatprep.subr.mxu0 0.0
        %1367 = vmatpush1.xpose.msra.mxu0 %v1323
        %1368 = vmatprep.subr.mxu0 0.0
        %1369 = vmatpush1.xpose.msra.mxu0 %v1326
        %1370 = vmatprep.subr.mxu0 0.0
        %1371 = vmatpush1.xpose.msra.mxu0 %v1329
        %1372 = vmatprep.subr.mxu0 0.0
        %1373 = vmatpush1.xpose.msra.mxu0 %v1332
        %1374 = vmatprep.subr.mxu0 0.0
        %1375 = vmatpush1.xpose.msra.mxu0 %v1335
        %1376 = vmatprep.subr.mxu0 0.0
        %1377 = vmatpush1.xpose.msra.mxu0 %v1338
        %1378 = vmatprep.subr.mxu0 0.0
        %1379 = vmatpush1.xpose.msra.mxu0 %v1341
        %1380 = vmatprep.subr.mxu0 0.0
        %1381 = vmatpush1.xpose.msra.mxu0 %v1344
        %1382 = vmatprep.subr.mxu0 0.0
        %1383 = vmatpush1.xpose.msra.mxu0 %v1347
        %1384 = vmatprep.subr.mxu0 0.0
        %1385 = vmatpush1.xpose.msra.mxu0 %v1350
        %1386 = vmatprep.subr.mxu0 0.0
        %1387 = vmatpush1.xpose.msra.mxu0 %v1353
        %1388 = vmatprep.subr.mxu0 0.0
        %1389 = vmatpush1.xpose.msra.mxu0 %v1356
        %1390 = vmatprep.subr.mxu0 0.0
        %1391 = vmatpush1.xpose.msra.mxu0 0.0
        %1392 = vmatprep.subr.mxu0 0.0
        %1393 = vmatpush1.xpose.msra.mxu0 0.0
        %1394 = vmatprep.subr.mxu0 0.0
        %1395 = vmatpush1.xpose.msra.mxu0 0.0
        %1396 = vmatprep.subr.mxu0 0.0
        %1397 = vmatpush1.xpose.msra.mxu0 0.0
        %1398 = vmatprep.subr.mxu0 0.0
        %1399 = vmatpush1.xpose.msra.mxu0 0.0
        %1400 = vmatprep.subr.mxu0 0.0
        %1401 = vmatpush1.xpose.msra.mxu0 0.0
        %1402 = vmatprep.subr.mxu0 0.0
        %1403 = vmatpush1.xpose.msra.mxu0 0.0
        %1404 = vmatprep.subr.mxu0 0.0
        %1405 = vmatpush1.xpose.msra.mxu0 0.0
        %1406 = vmatprep.subr.mxu0 0.0
        %1407 = vmatpush1.xpose.msra.mxu0 0.0
        %1408 = vmatprep.subr.mxu0 0.0
        %1409 = vmatpush1.xpose.msra.mxu0 0.0
        %1410 = vmatprep.subr.mxu0 0.0
        %1411 = vmatpush1.xpose.msra.mxu0 0.0
        %1412 = vmatprep.subr.mxu0 0.0
        %1413 = vmatpush1.xpose.msra.mxu0 0.0
        %1414 = vmatprep.subr.mxu0 0.0
        %1415 = vmatpush1.xpose.msra.mxu0 0.0
        %1416 = vmatprep.subr.mxu0 0.0
        %1417 = vmatpush1.xpose.msra.mxu0 0.0
        %1418 = vmatprep.subr.mxu0 0.0
        %1419 = vmatpush1.xpose.msra.mxu0 0.0
        %1420 = vmatprep.subr.mxu0 0.0
        %1421 = vmatpush1.xpose.msra.mxu0 0.0
        %1422 = vmatprep.mubr.f32.mxu0 0.0
        %1423 = vmatmul.mubr.f32.gmra.mrb[0].mxu0 %v1305
        %v1424 = vpop.f32.mrb[0].mxu0
        %v1425 = vadd.f32 0.0, %v1424
        %v1426 = vpop.f32.mrb[0].mxu0
        %1427 = vmatprep.mubr.f32.mxu0 0.0
        %1428 = vmatmul.mubr.f32.gmra.mrb[0].mxu0 %v1308
        %v1429 = vpop.f32.mrb[0].mxu0
        %v1430 = vadd.f32 0.0, %v1429
        %v1431 = vpop.f32.mrb[0].mxu0
        %1432 = vdwg.mxu0
        %1433 = vst [vmem:[%s391] sm:$0xff] %v1425
        %1434 = vst [vmem:[%s391 + $0x8] sm:$0xff] %v1430
        %s1435 = smul.u32 16, %s29
        %p1436 = scmp.lt.s32.totalorder %s1435, 31
        %s1437 = scalar_select %p1436, %s1435, 31
        %s1438 = smul.addr %s1437, 8
        %s1439 = scalar_lea.vmem %s8, %s1438
        %s1440 = sand.u32 %s236, 1
        %s1441 = scalar_lea.sflag [#allocation3], %s1440
        %s1442 = sand.u32 %s236, 1
        %s1443 = smul.addr %s1442, 16
        %s1444 = scalar_lea.vmem [#allocation2], %s1443
        %s1445 = smul.u32 16, %s29
        %p1446 = scmp.lt.s32.totalorder %s1445, 31
        %s1447 = scalar_select %p1446, %s1445, 31
        %s1448 = smul.addr %s1447, 8
        %s1449 = scalar_lea.vmem %s10, %s1448
        %s1450 = sand.u32 %s288, 1
        %s1451 = scalar_lea.sflag [#allocation5], %s1450
        %s1452 = sand.u32 %s288, 1
        %s1453 = scalar_lea.vmem [#allocation4], %s1452
        // Predicated region
        $region53: #{tpu_custom_call.1} parent=51 // pred_check
          %p1454 = pneg %p220
        $region54: #{tpu_custom_call.1} parent=51 // pred_check_branch
          %1456 = sbr.rel (%p1454) target = $region56
        $region55: #{tpu_custom_call.1} parent=51 // pred_region
          %s1457 = smul.u32 16, %s29
        $region56: #{tpu_custom_call.1} parent=51 // pred_fallthru
          _
        // Predicated region
        $region57: #{tpu_custom_call.1} parent=51 // pred_check
          %p1458 = pneg %p246
        $region58: #{tpu_custom_call.1} parent=51 // pred_check_branch
          %1460 = sbr.rel (%p1458) target = $region60
        $region59: #{tpu_custom_call.1} parent=51 // pred_region
          %s1462 = ssub.s32 256, 256
          %1463 = vsyncadd %s1441, %s1462
          %s1464 = smul.addr %s29, 128
          %s1465 = scalar_lea.hbm %s9, %s1464
          %s1466 = sshll.u32 %s1444, 4
          %s1467 = int_to_ptr.vmem [resolvable:$true] %s1466
          %1472 = dma.vmem_to_hbm [thread:$0]  %s1467, 256, %s1465, %s1441, 128, 256, 8
        $region60: #{tpu_custom_call.1} parent=51 // pred_fallthru
          _
        // Predicated region
        $region61: #{tpu_custom_call.1} parent=51 // pred_check
          %p1473 = pneg %p272
        $region62: #{tpu_custom_call.1} parent=51 // pred_check_branch
          %1475 = sbr.rel (%p1473) target = $region64
        $region63: #{tpu_custom_call.1} parent=51 // pred_region
          %s1476 = smul.u32 16, %s29
        $region64: #{tpu_custom_call.1} parent=51 // pred_fallthru
          _
        // Predicated region
        $region65: #{tpu_custom_call.1} parent=51 // pred_check
          %p1477 = pneg %p298
        $region66: #{tpu_custom_call.1} parent=51 // pred_check_branch
          %1479 = sbr.rel (%p1477) target = $region68
        $region67: #{tpu_custom_call.1} parent=51 // pred_region
          %s1481 = ssub.s32 16, 16
          %1482 = vsyncadd %s1451, %s1481
          %s1483 = smul.addr %s29, 16
          %s1484 = scalar_lea.hbm %s11, %s1483
          %s1486 = sshll.u32 %s1453, 4
          %s1487 = int_to_ptr.vmem [resolvable:$true] %s1486
          %1489 = dma.vmem_to_hbm [thread:$0]  %s1487, 16, %s1484, %s1451
        $region68: #{tpu_custom_call.1} parent=51 // pred_fallthru
          _
      $region52: #{tpu_custom_call.1} parent=5 // pred_fallthru
        _
      %p1490 = scmp.le.s32.totalorder 2, %s24
      // Predicated region
      $region69: #{tpu_custom_call.1} parent=5 // pred_check
        %p1491 = pneg %p1490
      $region70: #{tpu_custom_call.1} parent=5 // pred_check_branch
        %1493 = sbr.rel (%p1491) target = $region72
      $region71: #{tpu_custom_call.1} parent=5 // pred_region
        %s1494 = ssub.s32 %s24, 2
        // Predicated region
        $region73: #{tpu_custom_call.1} parent=71 // pred_check
          %p1495 = pneg %p226
        $region74: #{tpu_custom_call.1} parent=71 // pred_check_branch
          %1497 = sbr.rel (%p1495) target = $region76
        $region75: #{tpu_custom_call.1} parent=71 // pred_region
          %s1498 = smul.u32 16, %s30
          %p1499 = scmp.lt.s32.totalorder %s1498, 31
          %s1500 = scalar_select %p1499, %s1498, 31
          %s1501 = smul.addr %s1500, 8
          %s1502 = scalar_lea.vmem %s8, %s1501
        $region76: #{tpu_custom_call.1} parent=71 // pred_fallthru
          _
        // Predicated region
        $region77: #{tpu_custom_call.1} parent=71 // pred_check
          %p1503 = pneg %p252
        $region78: #{tpu_custom_call.1} parent=71 // pred_check_branch
          %1505 = sbr.rel (%p1503) target = $region80
        $region79: #{tpu_custom_call.1} parent=71 // pred_region
          %s1506 = sand.u32 %s237, 1
          %s1507 = scalar_lea.sflag [#allocation3], %s1506
          %s1508 = sand.u32 %s237, 1
          %s1509 = smul.addr %s1508, 16
          %s1510 = scalar_lea.vmem [#allocation2], %s1509
          %1511 = dma.done %s1507, 256
        $region80: #{tpu_custom_call.1} parent=71 // pred_fallthru
          _
        // Predicated region
        $region81: #{tpu_custom_call.1} parent=71 // pred_check
          %p1512 = pneg %p278
        $region82: #{tpu_custom_call.1} parent=71 // pred_check_branch
          %1514 = sbr.rel (%p1512) target = $region84
        $region83: #{tpu_custom_call.1} parent=71 // pred_region
          %s1515 = smul.u32 16, %s30
          %p1516 = scmp.lt.s32.totalorder %s1515, 31
          %s1517 = scalar_select %p1516, %s1515, 31
          %s1518 = smul.addr %s1517, 8
          %s1519 = scalar_lea.vmem %s10, %s1518
        $region84: #{tpu_custom_call.1} parent=71 // pred_fallthru
          _
        // Predicated region
        $region85: #{tpu_custom_call.1} parent=71 // pred_check
          %p1520 = pneg %p304
        $region86: #{tpu_custom_call.1} parent=71 // pred_check_branch
          %1522 = sbr.rel (%p1520) target = $region88
        $region87: #{tpu_custom_call.1} parent=71 // pred_region
          %s1523 = sand.u32 %s289, 1
          %s1524 = scalar_lea.sflag [#allocation5], %s1523
          %s1525 = sand.u32 %s289, 1
          %s1526 = scalar_lea.vmem [#allocation4], %s1525
          %1527 = dma.done %s1524, 16
        $region88: #{tpu_custom_call.1} parent=71 // pred_fallthru
          _
      $region72: #{tpu_custom_call.1} parent=5 // pred_fallthru
        _
    $region6: #{tpu_custom_call.1} parent=1 // loop_footer
      %s28 = sadd.s32 1, %s24
    $region7: #{tpu_custom_call.1} parent=1 // loop_footer_branch
      %23 = sbr.rel target = $region3
    $region8: #{tpu_custom_call.1} parent=1 // loop_exit
      _
    %1528 = vsyncpa [#allocation3], 1
    %s1529 = scalar_lea.sflag [#allocation3], 1
    %1530 = vsyncpa %s1529, 1
    %1531 = vsyncpa [#allocation5], 1
    %s1532 = scalar_lea.sflag [#allocation5], 1
    %1533 = vsyncpa %s1532, 1

</llo_original>
